<compile_context>
chip_gen: v7x
topology: tpu7x:2x2x1
jax: 0.10.0
libtpu: 0.0.40
codegen_flags: <defaults>
</compile_context>

<pallas_src>
import jax
import jax.numpy as jnp
import numpy as np
from jax import lax
from jax.experimental import pallas as pl
from jax.experimental.pallas import tpu as pltpu

HIDDEN_LAYERS = 3
NUM_BLOCKS = HIDDEN_LAYERS + 1   # TextModel builds hidden_layers + 1 blocks
GATHER_DEPTH = 8                 # in-flight row DMAs for the vocab-table gather
LANE = 128                       # lane-dense padding target for H


def text_model_kernel(ids_ref, bounds_ref, emb_hbm, w0_ref, wrest_ref, bias_ref,
                      out_ref, tok_buf, sem):
    """ids_ref   [T]            int32  (SMEM)  token ids
       bounds_ref[B, 2]         int32  (VMEM)  per-bag [start, end)
       emb_hbm   [V, D]         f32    (HBM)   embedding table, rows DMA'd on demand
       w0_ref    [D, HP]        bf16   (VMEM)  block-0 weight (BN folded, H padded to HP)
       wrest_ref [NB-1, HP, HP] bf16   (VMEM)  remaining block weights (BN folded, padded)
       bias_ref  [NB, HP]       f32    (VMEM)  folded biases (padded)
       out_ref   [B, HP]        f32
       tok_buf   [T, D]         f32 scratch;  sem: GATHER_DEPTH DMA semaphores."""
    T, D = tok_buf.shape
    B = out_ref.shape[0]
    nbuf = sem.shape[0]

    # ---- Phase 0: vocab-table gather, nbuf row DMAs kept in flight.
    def row_copy(t, slot):
        # src slice is identical at start and wait time -> byte counts always match.
        return pltpu.make_async_copy(
            emb_hbm.at[pl.ds(ids_ref[t], 1), :],
            tok_buf.at[pl.ds(t, 1), :],
            sem.at[slot],
        )

    for s in range(nbuf):                       # static prologue (nbuf <= T)
        row_copy(s, s).start()

    # ---- Phase 1: membership / counts prep (independent of tok_buf -> overlaps DMAs).
    bounds = bounds_ref[...]                                   # [B, 2] int32
    lo = bounds[:, 0:1]                                        # [B, 1]
    hi = bounds[:, 1:2]                                        # [B, 1]
    t_idx = lax.broadcasted_iota(jnp.int32, (B, T), 1)         # [B, T]
    member = jnp.logical_and(t_idx >= lo, t_idx < hi)          # [B, T] bool
    seg = member.astype(jnp.bfloat16)                          # exact 0/1
    counts = jnp.maximum((hi - lo).astype(jnp.float32), 1.0)   # empty bag -> zero row
    inv_counts = 1.0 / counts                                  # [B, 1] f32

    # ---- Phase 2: drain the gather pipeline; re-issue t+nbuf on the freed slot.
    @pl.loop(0, T)
    def _(t):
        slot = t % nbuf
        row_copy(t, slot).wait()
        nxt = t + nbuf

        @pl.when(nxt < T)
        def _():
            row_copy(nxt, slot).start()

    # ---- Phase 3: EmbeddingBag(mode='mean') as a membership-matmul on the MXU.
    tok = tok_buf[...].astype(jnp.bfloat16)                    # one cast per matmul
    pooled = jnp.dot(seg, tok, preferred_element_type=jnp.float32)   # [B, D] f32
    x = pooled * inv_counts                                    # f32 (VPU)

    # ---- Phase 4: MLP blocks (Linear+BN folded) -> ReLU; bf16 matmul / f32 accumulate,
    #      lane-dense HP so stores are unmasked and the MXU N-dim is filled.
    biases = bias_ref[...]                                     # [NB, HP] f32
    y = jnp.dot(x.astype(jnp.bfloat16), w0_ref[...],
                preferred_element_type=jnp.float32) + biases[0:1, :]
    x = jnp.maximum(y, 0.0)
    for i in range(1, NUM_BLOCKS):
        y = jnp.dot(x.astype(jnp.bfloat16), wrest_ref[i - 1],
                    preferred_element_type=jnp.float32) + biases[i:i + 1, :]
        x = jnp.maximum(y, 0.0)

    out_ref[...] = x.astype(out_ref.dtype)


def fold_and_pack_params(block_params):
    """Fold eval-mode BN into the Linear weights/bias, pad the output features H to a
    multiple of 128 lanes, pre-cast weights to bf16, and pack into 3 operands:
      w0 [D, HP] bf16, w_rest [NB-1, HP, HP] bf16, biases [NB, HP] f32.
    Padded lanes carry zeros end-to-end (zero cols/rows + zero bias -> ReLU(0)=0)."""
    H = block_params[0][0].shape[1]
    HP = ((H + LANE - 1) // LANE) * LANE

    folded_w, folded_b = [], []
    for (w, b, sc, sh) in block_params:
        fw = w * sc[None, :]
        fb = b * sc + sh
        fw = jnp.pad(fw, ((0, 0), (0, HP - H)))                       # pad out-features
        fb = jnp.pad(fb, ((0, HP - H),))
        folded_w.append(fw)
        folded_b.append(fb)

    w0 = folded_w[0].astype(jnp.bfloat16)                             # [D, HP]
    w_rest = jnp.stack(
        [jnp.pad(w, ((0, HP - H), (0, 0))) for w in folded_w[1:]],    # pad in-features
        axis=0).astype(jnp.bfloat16)                                  # [NB-1, HP, HP]
    biases = jnp.stack(folded_b, axis=0).astype(jnp.float32)          # [NB, HP]
    return w0, w_rest, biases, H, HP


def text_model_forward(ids, offsets, emb_table, packed_params):
    """ids [T] int32, offsets [B] int32 (EmbeddingBag offsets), emb_table [V,D] f32."""
    T = ids.shape[0]
    B = offsets.shape[0]
    V, D = emb_table.shape
    w0, w_rest, biases, H, HP = packed_params
    nbuf = min(GATHER_DEPTH, T)

    ends = jnp.concatenate([offsets[1:], jnp.array([T], dtype=offsets.dtype)])
    bounds = jnp.stack([offsets, ends], axis=1).astype(jnp.int32)     # [B, 2]

    out = pl.pallas_call(
        text_model_kernel,
        out_shape=jax.ShapeDtypeStruct((B, HP), jnp.float32),
        in_specs=[
            pl.BlockSpec(memory_space=pltpu.MemorySpace.SMEM),   # ids -> SMEM scalars
            pl.BlockSpec(memory_space=pltpu.MemorySpace.VMEM),   # bounds
            pl.BlockSpec(memory_space=pl.ANY),                   # emb_table stays in HBM
            pl.BlockSpec(memory_space=pltpu.MemorySpace.VMEM),   # w0
            pl.BlockSpec(memory_space=pltpu.MemorySpace.VMEM),   # w_rest
            pl.BlockSpec(memory_space=pltpu.MemorySpace.VMEM),   # biases
        ],
        out_specs=pl.BlockSpec(memory_space=pltpu.MemorySpace.VMEM),
        scratch_shapes=[
            pltpu.VMEM((T, D), jnp.float32),       # gathered token embeddings
            pltpu.SemaphoreType.DMA((nbuf,)),      # ring of in-flight row DMAs
        ],
    )(ids.astype(jnp.int32), bounds, emb_table, w0, w_rest, biases)
    return out[:, :H]                                              # drop lane padding


def init_params(key, embedding_size, hidden_size, vocab_size):
    keys = jax.random.split(key, 2 + NUM_BLOCKS * 5)
    emb_table = jax.random.normal(keys[0], (vocab_size, embedding_size), jnp.float32) * 0.1

    in_channels = [embedding_size] + [hidden_size] * HIDDEN_LAYERS
    out_channels = [hidden_size] * NUM_BLOCKS
    eps = 1e-5
    block_params = []
    for i, (inc, outc) in enumerate(zip(in_channels, out_channels)):
        k = keys[2 + 5 * i: 2 + 5 * (i + 1)]
        w = jax.random.normal(k[0], (inc, outc), jnp.float32) * (1.0 / np.sqrt(inc))
        b = jax.random.normal(k[1], (outc,), jnp.float32) * 0.01
        gamma = 1.0 + 0.1 * jax.random.normal(k[2], (outc,), jnp.float32)
        beta = 0.1 * jax.random.normal(k[3], (outc,), jnp.float32)
        running_mean = 0.1 * jax.random.normal(k[4], (outc,), jnp.float32)
        running_var = jnp.ones((outc,), jnp.float32)
        # eval-mode BatchNorm1d as a per-feature affine (inference only)
        scale = gamma / jnp.sqrt(running_var + eps)
        shift = beta - running_mean * scale
        block_params.append((w, b, scale, shift))
    return emb_table, block_params


def reference_forward(ids, offsets, emb_table, block_params):
    """Pure f32 JAX reference with torch semantics: EmbeddingBag('mean') -> [Linear,BN(eval),ReLU]*4."""
    T = ids.shape[0]
    B = offsets.shape[0]
    tok = jnp.take(emb_table, ids, axis=0)                       # [T, D]
    bnds = jnp.concatenate([offsets, jnp.array([T], dtype=offsets.dtype)])
    bag = jnp.searchsorted(bnds, jnp.arange(T, dtype=offsets.dtype), side="right") - 1
    onehot = (bag[None, :] == jnp.arange(B)[:, None]).astype(jnp.float32)
    counts = jnp.maximum(onehot.sum(axis=1, keepdims=True), 1.0)
    x = (onehot @ tok) / counts
    for (w, b, sc, sh) in block_params:
        x = jnp.maximum((x @ w + b) * sc + sh, 0.0)
    return x


if __name__ == "__main__":
    # Small shapes consistent with the module (scaled down from 200k vocab / 200 dims)
    VOCAB = 1000        # vocab_size
    EMB = 32            # embedding_size
    HID = 32            # hidden_size
    B = 8               # number of bags (batch)
    T = 64              # total number of token ids across the batch

    key = jax.random.PRNGKey(0)
    k_param, k_ids = jax.random.split(key)

    emb_table, block_params = init_params(k_param, EMB, HID, VOCAB)
    packed = fold_and_pack_params(block_params)   # one-time fold + pad (inference only)

    ids = jax.random.randint(k_ids, (T,), 0, VOCAB, dtype=jnp.int32)
    # Ragged torch-style EmbeddingBag offsets (sorted, bag 1 intentionally empty).
    offsets = jnp.array([0, 5, 5, 20, 31, 40, 47, 58], dtype=jnp.int32)
    assert offsets.shape[0] == B

    out = jax.block_until_ready(text_model_forward(ids, offsets, emb_table, packed))
    ref = jax.block_until_ready(reference_forward(ids, offsets, emb_table, block_params))

    # 2e-2 tolerance is intentional: kernel uses bf16 MXU operands vs f32 reference.
    np.testing.assert_allclose(np.asarray(out), np.asarray(ref), rtol=2e-2, atol=2e-2)
    assert out.shape == (B, HID) and out.dtype == jnp.float32
    print("KERNEL_OK")
</pallas_src>

<mosaic_0001>
module attributes {stable_mosaic.version = 11 : i64} {
  func.func @text_model_kernel(%arg0: memref<64xi32, #tpu.memory_space<smem>>, %arg1: memref<8x2xi32, #tpu.memory_space<vmem>>, %arg2: memref<1000x32xf32, #tpu.memory_space<any>>, %arg3: memref<32x128xbf16, #tpu.memory_space<vmem>>, %arg4: memref<3x128x128xbf16, #tpu.memory_space<vmem>>, %arg5: memref<4x128xf32, #tpu.memory_space<vmem>>, %arg6: memref<8x128xf32, #tpu.memory_space<vmem>>, %arg7: memref<64x32xf32, #tpu.memory_space<vmem>>, %arg8: memref<8x!tpu.dma_semaphore, #tpu.memory_space<semaphore_mem>>) attributes {dimension_semantics = [], scalar_prefetch = 0 : i64, scratch_operands = 2 : i64, tpu.core_type = #tpu.core_type<tc>} {
    %c0 = arith.constant 0 : index
    %0 = memref.load %arg0[%c0] : memref<64xi32, #tpu.memory_space<smem>>
    %c0_i32 = arith.constant 0 : i32
    %c0_i32_0 = arith.constant 0 : i32
    %1 = tpu.memref_slice %arg2[%0, %c0_i32_0] : memref<1000x32xf32, #tpu.memory_space<any>> -> memref<1x32xf32, #tpu.memory_space<any>>
    %c0_i32_1 = arith.constant 0 : i32
    %c0_i32_2 = arith.constant 0 : i32
    %2 = tpu.memref_slice %arg7[%c0_i32_1, %c0_i32_2] : memref<64x32xf32, #tpu.memory_space<vmem>> -> memref<1x32xf32, #tpu.memory_space<vmem>>
    %3 = tpu.memref_slice %arg8[%c0_i32] : memref<8x!tpu.dma_semaphore, #tpu.memory_space<semaphore_mem>> -> memref<1x!tpu.dma_semaphore, #tpu.memory_space<semaphore_mem>>
    %4 = tpu.memref_squeeze %3 : memref<1x!tpu.dma_semaphore, #tpu.memory_space<semaphore_mem>> -> memref<!tpu.dma_semaphore, #tpu.memory_space<semaphore_mem>>
    tpu.enqueue_dma source(%1 : memref<1x32xf32, #tpu.memory_space<any>>) target(%2 : memref<1x32xf32, #tpu.memory_space<vmem>>) target_semaphore(%4 : memref<!tpu.dma_semaphore, #tpu.memory_space<semaphore_mem>>)
    %c1 = arith.constant 1 : index
    %5 = memref.load %arg0[%c1] : memref<64xi32, #tpu.memory_space<smem>>
    %c1_i32 = arith.constant 1 : i32
    %c0_i32_3 = arith.constant 0 : i32
    %6 = tpu.memref_slice %arg2[%5, %c0_i32_3] : memref<1000x32xf32, #tpu.memory_space<any>> -> memref<1x32xf32, #tpu.memory_space<any>>
    %c1_i32_4 = arith.constant 1 : i32
    %c0_i32_5 = arith.constant 0 : i32
    %7 = tpu.memref_slice %arg7[%c1_i32_4, %c0_i32_5] : memref<64x32xf32, #tpu.memory_space<vmem>> -> memref<1x32xf32, #tpu.memory_space<vmem>>
    %8 = tpu.memref_slice %arg8[%c1_i32] : memref<8x!tpu.dma_semaphore, #tpu.memory_space<semaphore_mem>> -> memref<1x!tpu.dma_semaphore, #tpu.memory_space<semaphore_mem>>
    %9 = tpu.memref_squeeze %8 : memref<1x!tpu.dma_semaphore, #tpu.memory_space<semaphore_mem>> -> memref<!tpu.dma_semaphore, #tpu.memory_space<semaphore_mem>>
    tpu.enqueue_dma source(%6 : memref<1x32xf32, #tpu.memory_space<any>>) target(%7 : memref<1x32xf32, #tpu.memory_space<vmem>>) target_semaphore(%9 : memref<!tpu.dma_semaphore, #tpu.memory_space<semaphore_mem>>)
    %c2 = arith.constant 2 : index
    %10 = memref.load %arg0[%c2] : memref<64xi32, #tpu.memory_space<smem>>
    %c2_i32 = arith.constant 2 : i32
    %c0_i32_6 = arith.constant 0 : i32
    %11 = tpu.memref_slice %arg2[%10, %c0_i32_6] : memref<1000x32xf32, #tpu.memory_space<any>> -> memref<1x32xf32, #tpu.memory_space<any>>
    %c2_i32_7 = arith.constant 2 : i32
    %c0_i32_8 = arith.constant 0 : i32
    %12 = tpu.memref_slice %arg7[%c2_i32_7, %c0_i32_8] : memref<64x32xf32, #tpu.memory_space<vmem>> -> memref<1x32xf32, #tpu.memory_space<vmem>>
    %13 = tpu.memref_slice %arg8[%c2_i32] : memref<8x!tpu.dma_semaphore, #tpu.memory_space<semaphore_mem>> -> memref<1x!tpu.dma_semaphore, #tpu.memory_space<semaphore_mem>>
    %14 = tpu.memref_squeeze %13 : memref<1x!tpu.dma_semaphore, #tpu.memory_space<semaphore_mem>> -> memref<!tpu.dma_semaphore, #tpu.memory_space<semaphore_mem>>
    tpu.enqueue_dma source(%11 : memref<1x32xf32, #tpu.memory_space<any>>) target(%12 : memref<1x32xf32, #tpu.memory_space<vmem>>) target_semaphore(%14 : memref<!tpu.dma_semaphore, #tpu.memory_space<semaphore_mem>>)
    %c3 = arith.constant 3 : index
    %15 = memref.load %arg0[%c3] : memref<64xi32, #tpu.memory_space<smem>>
    %c3_i32 = arith.constant 3 : i32
    %c0_i32_9 = arith.constant 0 : i32
    %16 = tpu.memref_slice %arg2[%15, %c0_i32_9] : memref<1000x32xf32, #tpu.memory_space<any>> -> memref<1x32xf32, #tpu.memory_space<any>>
    %c3_i32_10 = arith.constant 3 : i32
    %c0_i32_11 = arith.constant 0 : i32
    %17 = tpu.memref_slice %arg7[%c3_i32_10, %c0_i32_11] : memref<64x32xf32, #tpu.memory_space<vmem>> -> memref<1x32xf32, #tpu.memory_space<vmem>>
    %18 = tpu.memref_slice %arg8[%c3_i32] : memref<8x!tpu.dma_semaphore, #tpu.memory_space<semaphore_mem>> -> memref<1x!tpu.dma_semaphore, #tpu.memory_space<semaphore_mem>>
    %19 = tpu.memref_squeeze %18 : memref<1x!tpu.dma_semaphore, #tpu.memory_space<semaphore_mem>> -> memref<!tpu.dma_semaphore, #tpu.memory_space<semaphore_mem>>
    tpu.enqueue_dma source(%16 : memref<1x32xf32, #tpu.memory_space<any>>) target(%17 : memref<1x32xf32, #tpu.memory_space<vmem>>) target_semaphore(%19 : memref<!tpu.dma_semaphore, #tpu.memory_space<semaphore_mem>>)
    %c4 = arith.constant 4 : index
    %20 = memref.load %arg0[%c4] : memref<64xi32, #tpu.memory_space<smem>>
    %c4_i32 = arith.constant 4 : i32
    %c0_i32_12 = arith.constant 0 : i32
    %21 = tpu.memref_slice %arg2[%20, %c0_i32_12] : memref<1000x32xf32, #tpu.memory_space<any>> -> memref<1x32xf32, #tpu.memory_space<any>>
    %c4_i32_13 = arith.constant 4 : i32
    %c0_i32_14 = arith.constant 0 : i32
    %22 = tpu.memref_slice %arg7[%c4_i32_13, %c0_i32_14] : memref<64x32xf32, #tpu.memory_space<vmem>> -> memref<1x32xf32, #tpu.memory_space<vmem>>
    %23 = tpu.memref_slice %arg8[%c4_i32] : memref<8x!tpu.dma_semaphore, #tpu.memory_space<semaphore_mem>> -> memref<1x!tpu.dma_semaphore, #tpu.memory_space<semaphore_mem>>
    %24 = tpu.memref_squeeze %23 : memref<1x!tpu.dma_semaphore, #tpu.memory_space<semaphore_mem>> -> memref<!tpu.dma_semaphore, #tpu.memory_space<semaphore_mem>>
    tpu.enqueue_dma source(%21 : memref<1x32xf32, #tpu.memory_space<any>>) target(%22 : memref<1x32xf32, #tpu.memory_space<vmem>>) target_semaphore(%24 : memref<!tpu.dma_semaphore, #tpu.memory_space<semaphore_mem>>)
    %c5 = arith.constant 5 : index
    %25 = memref.load %arg0[%c5] : memref<64xi32, #tpu.memory_space<smem>>
    %c5_i32 = arith.constant 5 : i32
    %c0_i32_15 = arith.constant 0 : i32
    %26 = tpu.memref_slice %arg2[%25, %c0_i32_15] : memref<1000x32xf32, #tpu.memory_space<any>> -> memref<1x32xf32, #tpu.memory_space<any>>
    %c5_i32_16 = arith.constant 5 : i32
    %c0_i32_17 = arith.constant 0 : i32
    %27 = tpu.memref_slice %arg7[%c5_i32_16, %c0_i32_17] : memref<64x32xf32, #tpu.memory_space<vmem>> -> memref<1x32xf32, #tpu.memory_space<vmem>>
    %28 = tpu.memref_slice %arg8[%c5_i32] : memref<8x!tpu.dma_semaphore, #tpu.memory_space<semaphore_mem>> -> memref<1x!tpu.dma_semaphore, #tpu.memory_space<semaphore_mem>>
    %29 = tpu.memref_squeeze %28 : memref<1x!tpu.dma_semaphore, #tpu.memory_space<semaphore_mem>> -> memref<!tpu.dma_semaphore, #tpu.memory_space<semaphore_mem>>
    tpu.enqueue_dma source(%26 : memref<1x32xf32, #tpu.memory_space<any>>) target(%27 : memref<1x32xf32, #tpu.memory_space<vmem>>) target_semaphore(%29 : memref<!tpu.dma_semaphore, #tpu.memory_space<semaphore_mem>>)
    %c6 = arith.constant 6 : index
    %30 = memref.load %arg0[%c6] : memref<64xi32, #tpu.memory_space<smem>>
    %c6_i32 = arith.constant 6 : i32
    %c0_i32_18 = arith.constant 0 : i32
    %31 = tpu.memref_slice %arg2[%30, %c0_i32_18] : memref<1000x32xf32, #tpu.memory_space<any>> -> memref<1x32xf32, #tpu.memory_space<any>>
    %c6_i32_19 = arith.constant 6 : i32
    %c0_i32_20 = arith.constant 0 : i32
    %32 = tpu.memref_slice %arg7[%c6_i32_19, %c0_i32_20] : memref<64x32xf32, #tpu.memory_space<vmem>> -> memref<1x32xf32, #tpu.memory_space<vmem>>
    %33 = tpu.memref_slice %arg8[%c6_i32] : memref<8x!tpu.dma_semaphore, #tpu.memory_space<semaphore_mem>> -> memref<1x!tpu.dma_semaphore, #tpu.memory_space<semaphore_mem>>
    %34 = tpu.memref_squeeze %33 : memref<1x!tpu.dma_semaphore, #tpu.memory_space<semaphore_mem>> -> memref<!tpu.dma_semaphore, #tpu.memory_space<semaphore_mem>>
    tpu.enqueue_dma source(%31 : memref<1x32xf32, #tpu.memory_space<any>>) target(%32 : memref<1x32xf32, #tpu.memory_space<vmem>>) target_semaphore(%34 : memref<!tpu.dma_semaphore, #tpu.memory_space<semaphore_mem>>)
    %c7 = arith.constant 7 : index
    %35 = memref.load %arg0[%c7] : memref<64xi32, #tpu.memory_space<smem>>
    %c7_i32 = arith.constant 7 : i32
    %c0_i32_21 = arith.constant 0 : i32
    %36 = tpu.memref_slice %arg2[%35, %c0_i32_21] : memref<1000x32xf32, #tpu.memory_space<any>> -> memref<1x32xf32, #tpu.memory_space<any>>
    %c7_i32_22 = arith.constant 7 : i32
    %c0_i32_23 = arith.constant 0 : i32
    %37 = tpu.memref_slice %arg7[%c7_i32_22, %c0_i32_23] : memref<64x32xf32, #tpu.memory_space<vmem>> -> memref<1x32xf32, #tpu.memory_space<vmem>>
    %38 = tpu.memref_slice %arg8[%c7_i32] : memref<8x!tpu.dma_semaphore, #tpu.memory_space<semaphore_mem>> -> memref<1x!tpu.dma_semaphore, #tpu.memory_space<semaphore_mem>>
    %39 = tpu.memref_squeeze %38 : memref<1x!tpu.dma_semaphore, #tpu.memory_space<semaphore_mem>> -> memref<!tpu.dma_semaphore, #tpu.memory_space<semaphore_mem>>
    tpu.enqueue_dma source(%36 : memref<1x32xf32, #tpu.memory_space<any>>) target(%37 : memref<1x32xf32, #tpu.memory_space<vmem>>) target_semaphore(%39 : memref<!tpu.dma_semaphore, #tpu.memory_space<semaphore_mem>>)
    %c0_24 = arith.constant 0 : index
    %c0_25 = arith.constant 0 : index
    %40 = vector.load %arg1[%c0_24, %c0_25] : memref<8x2xi32, #tpu.memory_space<vmem>>, vector<8x2xi32>
    %41 = vector.extract_strided_slice %40 {offsets = [0, 0], sizes = [8, 1], strides = [1, 1]} : vector<8x2xi32> to vector<8x1xi32>
    %42 = vector.extract_strided_slice %40 {offsets = [0, 1], sizes = [8, 1], strides = [1, 1]} : vector<8x2xi32> to vector<8x1xi32>
    %43 = tpu.iota {dimensions = array<i32: 1>} : vector<8x64xi32>
    %44 = vector.broadcast %41 : vector<8x1xi32> to vector<8x64xi32>
    %45 = arith.cmpi sge, %43, %44 : vector<8x64xi32>
    %46 = vector.broadcast %42 : vector<8x1xi32> to vector<8x64xi32>
    %47 = arith.cmpi slt, %43, %46 : vector<8x64xi32>
    %48 = arith.andi %45, %47 : vector<8x64xi1>
    %49 = arith.extui %48 : vector<8x64xi1> to vector<8x64xi32>
    %50 = arith.sitofp %49 : vector<8x64xi32> to vector<8x64xf32>
    %51 = arith.truncf %50 : vector<8x64xf32> to vector<8x64xbf16>
    %52 = arith.subi %42, %41 : vector<8x1xi32>
    %53 = arith.sitofp %52 : vector<8x1xi32> to vector<8x1xf32>
    %cst = arith.constant 1.000000e+00 : f32
    %54 = vector.broadcast %cst : f32 to vector<8x1xf32>
    %55 = arith.maximumf %53, %54 : vector<8x1xf32>
    %cst_26 = arith.constant 1.000000e+00 : f32
    %56 = vector.broadcast %cst_26 : f32 to vector<8x1xf32>
    %57 = arith.divf %56, %55 : vector<8x1xf32>
    %c0_i32_27 = arith.constant 0 : i32
    %c64_i32 = arith.constant 64 : i32
    %58 = arith.addi %c0_i32_27, %c64_i32 : i32
    %c1_i32_28 = arith.constant 1 : i32
    scf.for %arg9 = %c0_i32_27 to %58 step %c1_i32_28  : i32 {
      %c1_i32_56 = arith.constant 1 : i32
      %101 = arith.muli %arg9, %c1_i32_56 : i32
      %c0_i32_57 = arith.constant 0 : i32
      %102 = arith.addi %c0_i32_57, %101 : i32
      %c8_i32 = arith.constant 8 : i32
      %c0_i32_58 = arith.constant 0 : i32
      %103 = arith.cmpi eq, %c8_i32, %c0_i32_58 : i32
      %c1_i32_59 = arith.constant 1 : i32
      %104 = arith.select %103, %c1_i32_59, %c8_i32 : i32
      %105 = arith.remsi %102, %104 : i32
      %c0_i32_60 = arith.constant 0 : i32
      %106 = arith.cmpi ne, %105, %c0_i32_60 : i32
      %c0_i32_61 = arith.constant 0 : i32
      %107 = arith.cmpi slt, %105, %c0_i32_61 : i32
      %c0_i32_62 = arith.constant 0 : i32
      %108 = arith.cmpi slt, %104, %c0_i32_62 : i32
      %109 = arith.xori %107, %108 : i1
      %110 = arith.andi %109, %106 : i1
      %111 = arith.addi %105, %104 : i32
      %112 = arith.select %110, %111, %105 : i32
      %113 = arith.index_cast %102 : i32 to index
      %114 = memref.load %arg0[%113] : memref<64xi32, #tpu.memory_space<smem>>
      %c0_i32_63 = arith.constant 0 : i32
      %115 = tpu.memref_slice %arg2[%114, %c0_i32_63] : memref<1000x32xf32, #tpu.memory_space<any>> -> memref<1x32xf32, #tpu.memory_space<any>>
      %c0_i32_64 = arith.constant 0 : i32
      %116 = tpu.memref_slice %arg7[%102, %c0_i32_64] : memref<64x32xf32, #tpu.memory_space<vmem>> -> memref<1x32xf32, #tpu.memory_space<vmem>>
      %117 = tpu.memref_slice %arg8[%112] : memref<8x!tpu.dma_semaphore, #tpu.memory_space<semaphore_mem>> -> memref<1x!tpu.dma_semaphore, #tpu.memory_space<semaphore_mem>>
      %118 = tpu.memref_squeeze %117 : memref<1x!tpu.dma_semaphore, #tpu.memory_space<semaphore_mem>> -> memref<!tpu.dma_semaphore, #tpu.memory_space<semaphore_mem>>
      tpu.wait_dma2 semaphore(%118 : memref<!tpu.dma_semaphore, #tpu.memory_space<semaphore_mem>>) src(%115 : memref<1x32xf32, #tpu.memory_space<any>>) dst(%116 : memref<1x32xf32, #tpu.memory_space<vmem>>)
      %c8_i32_65 = arith.constant 8 : i32
      %119 = arith.addi %102, %c8_i32_65 : i32
      %c64_i32_66 = arith.constant 64 : i32
      %120 = arith.cmpi slt, %119, %c64_i32_66 : i32
      %121 = arith.extui %120 : i1 to i32
      %c0_i32_67 = arith.constant 0 : i32
      %122 = arith.cmpi ne, %121, %c0_i32_67 : i32
      scf.if %122 {
        %123 = arith.index_cast %119 : i32 to index
        %124 = memref.load %arg0[%123] : memref<64xi32, #tpu.memory_space<smem>>
        %c0_i32_68 = arith.constant 0 : i32
        %125 = tpu.memref_slice %arg2[%124, %c0_i32_68] : memref<1000x32xf32, #tpu.memory_space<any>> -> memref<1x32xf32, #tpu.memory_space<any>>
        %c0_i32_69 = arith.constant 0 : i32
        %126 = tpu.memref_slice %arg7[%119, %c0_i32_69] : memref<64x32xf32, #tpu.memory_space<vmem>> -> memref<1x32xf32, #tpu.memory_space<vmem>>
        %127 = tpu.memref_slice %arg8[%112] : memref<8x!tpu.dma_semaphore, #tpu.memory_space<semaphore_mem>> -> memref<1x!tpu.dma_semaphore, #tpu.memory_space<semaphore_mem>>
        %128 = tpu.memref_squeeze %127 : memref<1x!tpu.dma_semaphore, #tpu.memory_space<semaphore_mem>> -> memref<!tpu.dma_semaphore, #tpu.memory_space<semaphore_mem>>
        tpu.enqueue_dma source(%125 : memref<1x32xf32, #tpu.memory_space<any>>) target(%126 : memref<1x32xf32, #tpu.memory_space<vmem>>) target_semaphore(%128 : memref<!tpu.dma_semaphore, #tpu.memory_space<semaphore_mem>>)
      } else {
      }
    }
    %c64_i32_29 = arith.constant 64 : i32
    %c0_30 = arith.constant 0 : index
    %c0_31 = arith.constant 0 : index
    %59 = vector.load %arg7[%c0_30, %c0_31] : memref<64x32xf32, #tpu.memory_space<vmem>>, vector<64x32xf32>
    %60 = arith.truncf %59 : vector<64x32xf32> to vector<64x32xbf16>
    %cst_32 = arith.constant dense<0.000000e+00> : vector<8x32xf32>
    %61 = tpu.matmul %51, %60, %cst_32 {dimension_numbers = #tpu.dot_dimension_numbers<[1], [0], [0], [1], [0, 0, 1, 1], [], []>} : vector<8x64xbf16>, vector<64x32xbf16>, vector<8x32xf32> -> vector<8x32xf32>
    %62 = vector.broadcast %57 : vector<8x1xf32> to vector<8x32xf32>
    %63 = arith.mulf %61, %62 : vector<8x32xf32>
    %c0_33 = arith.constant 0 : index
    %c0_34 = arith.constant 0 : index
    %64 = vector.load %arg5[%c0_33, %c0_34] : memref<4x128xf32, #tpu.memory_space<vmem>>, vector<4x128xf32>
    %65 = arith.truncf %63 : vector<8x32xf32> to vector<8x32xbf16>
    %c0_35 = arith.constant 0 : index
    %c0_36 = arith.constant 0 : index
    %66 = vector.load %arg3[%c0_35, %c0_36] : memref<32x128xbf16, #tpu.memory_space<vmem>>, vector<32x128xbf16>
    %cst_37 = arith.constant dense<0.000000e+00> : vector<8x128xf32>
    %67 = tpu.matmul %65, %66, %cst_37 {dimension_numbers = #tpu.dot_dimension_numbers<[1], [0], [0], [1], [0, 0, 1, 1], [], []>} : vector<8x32xbf16>, vector<32x128xbf16>, vector<8x128xf32> -> vector<8x128xf32>
    %68 = vector.extract_strided_slice %64 {offsets = [0, 0], sizes = [1, 128], strides = [1, 1]} : vector<4x128xf32> to vector<1x128xf32>
    %69 = vector.broadcast %68 : vector<1x128xf32> to vector<8x128xf32>
    %70 = arith.addf %67, %69 : vector<8x128xf32>
    %cst_38 = arith.constant 0.000000e+00 : f32
    %71 = vector.broadcast %cst_38 : f32 to vector<8x128xf32>
    %72 = arith.maximumf %70, %71 : vector<8x128xf32>
    %73 = arith.truncf %72 : vector<8x128xf32> to vector<8x128xbf16>
    %c0_39 = arith.constant 0 : index
    %c0_40 = arith.constant 0 : index
    %c0_41 = arith.constant 0 : index
    %74 = vector.load %arg4[%c0_39, %c0_40, %c0_41] : memref<3x128x128xbf16, #tpu.memory_space<vmem>>, vector<1x128x128xbf16>
    %75 = vector.shape_cast %74 : vector<1x128x128xbf16> to vector<128x128xbf16>
    %cst_42 = arith.constant dense<0.000000e+00> : vector<8x128xf32>
    %76 = tpu.matmul %73, %75, %cst_42 {dimension_numbers = #tpu.dot_dimension_numbers<[1], [0], [0], [1], [0, 0, 1, 1], [], []>} : vector<8x128xbf16>, vector<128x128xbf16>, vector<8x128xf32> -> vector<8x128xf32>
    %77 = vector.extract_strided_slice %64 {offsets = [1, 0], sizes = [1, 128], strides = [1, 1]} : vector<4x128xf32> to vector<1x128xf32>
    %78 = vector.broadcast %77 : vector<1x128xf32> to vector<8x128xf32>
    %79 = arith.addf %76, %78 : vector<8x128xf32>
    %cst_43 = arith.constant 0.000000e+00 : f32
    %80 = vector.broadcast %cst_43 : f32 to vector<8x128xf32>
    %81 = arith.maximumf %79, %80 : vector<8x128xf32>
    %82 = arith.truncf %81 : vector<8x128xf32> to vector<8x128xbf16>
    %c1_44 = arith.constant 1 : index
    %c0_45 = arith.constant 0 : index
    %c0_46 = arith.constant 0 : index
    %83 = vector.load %arg4[%c1_44, %c0_45, %c0_46] : memref<3x128x128xbf16, #tpu.memory_space<vmem>>, vector<1x128x128xbf16>
    %84 = vector.shape_cast %83 : vector<1x128x128xbf16> to vector<128x128xbf16>
    %cst_47 = arith.constant dense<0.000000e+00> : vector<8x128xf32>
    %85 = tpu.matmul %82, %84, %cst_47 {dimension_numbers = #tpu.dot_dimension_numbers<[1], [0], [0], [1], [0, 0, 1, 1], [], []>} : vector<8x128xbf16>, vector<128x128xbf16>, vector<8x128xf32> -> vector<8x128xf32>
    %86 = vector.extract_strided_slice %64 {offsets = [2, 0], sizes = [1, 128], strides = [1, 1]} : vector<4x128xf32> to vector<1x128xf32>
    %87 = vector.broadcast %86 : vector<1x128xf32> to vector<8x128xf32>
    %88 = arith.addf %85, %87 : vector<8x128xf32>
    %cst_48 = arith.constant 0.000000e+00 : f32
    %89 = vector.broadcast %cst_48 : f32 to vector<8x128xf32>
    %90 = arith.maximumf %88, %89 : vector<8x128xf32>
    %91 = arith.truncf %90 : vector<8x128xf32> to vector<8x128xbf16>
    %c2_49 = arith.constant 2 : index
    %c0_50 = arith.constant 0 : index
    %c0_51 = arith.constant 0 : index
    %92 = vector.load %arg4[%c2_49, %c0_50, %c0_51] : memref<3x128x128xbf16, #tpu.memory_space<vmem>>, vector<1x128x128xbf16>
    %93 = vector.shape_cast %92 : vector<1x128x128xbf16> to vector<128x128xbf16>
    %cst_52 = arith.constant dense<0.000000e+00> : vector<8x128xf32>
    %94 = tpu.matmul %91, %93, %cst_52 {dimension_numbers = #tpu.dot_dimension_numbers<[1], [0], [0], [1], [0, 0, 1, 1], [], []>} : vector<8x128xbf16>, vector<128x128xbf16>, vector<8x128xf32> -> vector<8x128xf32>
    %95 = vector.extract_strided_slice %64 {offsets = [3, 0], sizes = [1, 128], strides = [1, 1]} : vector<4x128xf32> to vector<1x128xf32>
    %96 = vector.broadcast %95 : vector<1x128xf32> to vector<8x128xf32>
    %97 = arith.addf %94, %96 : vector<8x128xf32>
    %cst_53 = arith.constant 0.000000e+00 : f32
    %98 = vector.broadcast %cst_53 : f32 to vector<8x128xf32>
    %99 = arith.maximumf %97, %98 : vector<8x128xf32>
    %c0_54 = arith.constant 0 : index
    %c0_55 = arith.constant 0 : index
    %100 = vector.load %arg6[%c0_54, %c0_55] : memref<8x128xf32, #tpu.memory_space<vmem>>, vector<8x128xf32>
    tpu.vector_store %arg6[%c0_54, %c0_55], %99 {strides = array<i32>} : memref<8x128xf32, #tpu.memory_space<vmem>>, vector<8x128xf32>,
    return
  }
}

</mosaic_0001>

<llo_original>
// kernel: tpu_custom_call.1
$region0: #{tpu_custom_call.1}
  #allocation0 [shape = 'u32[]', space=smem, size = 0x4, offset = 0x4, fixed_abs, tag = 'smem constant byte address 0x4 - core index']
  #allocation1 [shape = 'u32[144,128]{1,0:T(1,128)}', space=vmem, size = 0x12000, scoped, tag = 'internal scratch']
  #allocation2 [shape = 'f32[64,32]{1,0:T(8,128)}', space=vmem, size = 0x8000, scoped, tag = 'scratch operand']
  #allocation3 [shape = 's32[8]{0}', space=sflag, size = 0x20, scoped, tag = 'scratch operand']
  #allocation8 [shape = 's32[]', space=sflag, size = 0x4, offset = 0, fixed_abs, tag = 'sflag constant byte address 0x0 - dummy sync flag']
  #allocation9 [shape = 's32[]', space=sflag, size = 0x4, offset = 0, fixed_abs, tag = 'sflag constant byte address 0x0 - dummy sync flag']
  #allocation10 [shape = 's32[]', space=sflag, size = 0x4, offset = 0, fixed_abs, tag = 'sflag constant byte address 0x0 - dummy sync flag']
  #allocation11 [shape = 's32[]', space=sflag, size = 0x4, offset = 0, fixed_abs, tag = 'sflag constant byte address 0x0 - dummy sync flag']
  #allocation12 [shape = 's32[]', space=sflag, size = 0x4, offset = 0, fixed_abs, tag = 'sflag constant byte address 0x0 - dummy sync flag']
  #allocation13 [shape = 's32[]', space=sflag, size = 0x4, offset = 0, fixed_abs, tag = 'sflag constant byte address 0x0 - dummy sync flag']
  #allocation14 [shape = 's32[]', space=sflag, size = 0x4, offset = 0, fixed_abs, tag = 'sflag constant byte address 0x0 - dummy sync flag']
  #allocation15 [shape = 's32[]', space=sflag, size = 0x4, offset = 0, fixed_abs, tag = 'sflag constant byte address 0x0 - dummy sync flag']
  #allocation16 [shape = 's32[]', space=sflag, size = 0x4, offset = 0, fixed_abs, tag = 'sflag constant byte address 0x0 - dummy sync flag']
  %s0 = inlined_call_operand.vmem [shape: s32[64], index: 0, kind: input, shape index: {}]
  %s1 = inlined_call_operand.vmem [shape: s32[8,2], index: 1, kind: input, shape index: {}]
  %s2 = inlined_call_operand.vmem [shape: f32[1000,32], index: 2, kind: input, shape index: {}]
  %s3 = inlined_call_operand.vmem [shape: bf16[32,128], index: 3, kind: input, shape index: {}]
  %s4 = inlined_call_operand.vmem [shape: bf16[3,128,128], index: 4, kind: input, shape index: {}]
  %s5 = inlined_call_operand.vmem [shape: f32[4,128], index: 5, kind: input, shape index: {}]
  %s6 = inlined_call_operand.hbm [shape: f32[8,128], index: 6, kind: output, shape index: {}]
  %s7 = sld [smem:[#allocation0]]
  $region315: #{tpu_custom_call.1} parent=0
    _
  %s9 = ssub.s32 1, %s7
  %s10 = scalar_select 0, %s9, %s7
  $region1: #{tpu_custom_call.1} parent=0
    #allocation4 [shape = 'u8[512]{0}', space=smem, size = 0x200, scoped, tag = 'input window, operand 0, single buffered']
    #allocation5 [shape = 's32[1]{0}', space=sflag, size = 0x4, scoped, tag = 'scoped memory for tpu_custom_call.1']
    #allocation6 [shape = 's32[1]{0}', space=sflag, size = 0x4, scoped, tag = 'scoped memory for tpu_custom_call.1']
    #allocation7 [shape = 'u8[4096]{0}', space=vmem, size = 0x1000, scoped, tag = 'output window, operand 0, single buffered']
    %11 = vsyncpa [#allocation6], 0
    %12 = vsyncpa [#allocation5], 0
    // Predicated region
    $region2: #{tpu_custom_call.1} parent=1 // pred_check
      _
    $region3: #{tpu_custom_call.1} parent=1 // pred_check_branch
      %14 = sbr.rel (0) target = $region5
    $region4: #{tpu_custom_call.1} parent=1 // pred_region
      %s16 = ssub.s32 16, 16
      %17 = vsyncadd [#allocation6], %s16
      %s19 = sshll.u32 %s0, 4
      %s20 = int_to_ptr.vmem [resolvable:$true] %s19
      %22 = dma.vmem_to_smem %s20, 16, [#allocation4], [#allocation6]
    $region5: #{tpu_custom_call.1} parent=1 // pred_fallthru
      _
    // Predicated region
    $region6: #{tpu_custom_call.1} parent=1 // pred_check
      _
    $region7: #{tpu_custom_call.1} parent=1 // pred_check_branch
      %24 = sbr.rel (0) target = $region9
    $region8: #{tpu_custom_call.1} parent=1 // pred_region
      _
    $region9: #{tpu_custom_call.1} parent=1 // pred_fallthru
      _
    // Predicated region
    $region10: #{tpu_custom_call.1} parent=1 // pred_check
      _
    $region11: #{tpu_custom_call.1} parent=1 // pred_check_branch
      %26 = sbr.rel (0) target = $region13
    $region12: #{tpu_custom_call.1} parent=1 // pred_region
      _
    $region13: #{tpu_custom_call.1} parent=1 // pred_fallthru
      _
    // Predicated region
    $region14: #{tpu_custom_call.1} parent=1 // pred_check
      _
    $region15: #{tpu_custom_call.1} parent=1 // pred_check_branch
      %28 = sbr.rel (0) target = $region17
    $region16: #{tpu_custom_call.1} parent=1 // pred_region
      _
    $region17: #{tpu_custom_call.1} parent=1 // pred_fallthru
      _
    // Predicated region
    $region18: #{tpu_custom_call.1} parent=1 // pred_check
      _
    $region19: #{tpu_custom_call.1} parent=1 // pred_check_branch
      %30 = sbr.rel (0) target = $region21
    $region20: #{tpu_custom_call.1} parent=1 // pred_region
      _
    $region21: #{tpu_custom_call.1} parent=1 // pred_fallthru
      _
    // Predicated region
    $region22: #{tpu_custom_call.1} parent=1 // pred_check
      _
    $region23: #{tpu_custom_call.1} parent=1 // pred_check_branch
      %32 = sbr.rel (0) target = $region25
    $region24: #{tpu_custom_call.1} parent=1 // pred_region
      %33 = dma.done [#allocation6], 16
    $region25: #{tpu_custom_call.1} parent=1 // pred_fallthru
      _
    %34 = sfence
    %s36 = sld [smem:[#allocation4]]
    %s37 = scalar_lea.vmem %s2, %s36
    %p39 = scmp.lt.u32.totalorder 1, 8
    %p40 = pneg %p39
    // Predicated region
    $region26: #{tpu_custom_call.1} parent=1 // pred_check
      _
    $region27: #{tpu_custom_call.1} parent=1 // pred_check_branch
      %42 = sbr.rel (%p39) target = $region29
    $region28: #{tpu_custom_call.1} parent=1 // pred_region
      %s57 = sand.u32 1, 7
      %p58 = scmp.eq.s32.totalorder %s57, 0
      %p59 = pneg %p58
      // Predicated region
      $region41: #{tpu_custom_call.1} parent=28 // pred_check
        _
      $region42: #{tpu_custom_call.1} parent=28 // pred_check_branch
        %61 = sbr.rel (%p58) target = $region44
      $region43: #{tpu_custom_call.1} parent=28 // pred_region
        %s62 = sand.u32 1, 7
        %s63 = ssub.s32 1, %s62
        %s64 = scalar_lea.vmem %s37, %s63
        %s65 = ssub.s32 1, %s62
        %s66 = scalar_lea.vmem [#allocation2], %s65
        %s67 = sshllo.u32 0, %s62
        loop: start=0, step=1, limit=1
        $region45: #{tpu_custom_call.1} parent=43 // loop_pre_header
          _
        $region46: #{tpu_custom_call.1} parent=43 // loop_header
          %s69 = sphi 0, %s73
          %p70 = scmp.ge.s32.totalorder %s69, 1
          %s74 = sphi %s64, %s64
          %s75 = sphi %s66, %s66
        $region47: #{tpu_custom_call.1} parent=43 // loop_header_branch
          %72 = sbr.rel (%p70) target = $region51
        $region48: #{tpu_custom_call.1} parent=43 // loop_body
          %v76 = vld [vmem:[%s74] sm:%s67]
          %77 = vst [vmem:[%s75] sm:%s67] %v76
        $region49: #{tpu_custom_call.1} parent=43 // loop_footer
          %s73 = sadd.s32 1, %s69
        $region50: #{tpu_custom_call.1} parent=43 // loop_footer_branch
          %68 = sbr.rel target = $region46
        $region51: #{tpu_custom_call.1} parent=43 // loop_exit
          _
      $region44: #{tpu_custom_call.1} parent=28 // pred_fallthru
        _
    $region29: #{tpu_custom_call.1} parent=1 // pred_fallthru
      _
    // Predicated region
    $region30: #{tpu_custom_call.1} parent=1 // pred_check
      %p43 = pneg %p39
    $region31: #{tpu_custom_call.1} parent=1 // pred_check_branch
      %45 = sbr.rel (%p43) target = $region33
    $region32: #{tpu_custom_call.1} parent=1 // pred_region
      %s46 = sshllo.u32 0, 1
      loop: start=0, step=1, limit=1
      $region34: #{tpu_custom_call.1} parent=32 // loop_pre_header
        _
      $region35: #{tpu_custom_call.1} parent=32 // loop_header
        %s48 = sphi 0, %s52
        %p49 = scmp.ge.s32.totalorder %s48, 1
        %s53 = sphi %s37, %s37
        %s54 = sphi [#allocation2], [#allocation2]
      $region36: #{tpu_custom_call.1} parent=32 // loop_header_branch
        %51 = sbr.rel (%p49) target = $region40
      $region37: #{tpu_custom_call.1} parent=32 // loop_body
        %v55 = vld [vmem:[%s53] sm:%s46]
        %56 = vst [vmem:[%s54] sm:%s46] %v55
      $region38: #{tpu_custom_call.1} parent=32 // loop_footer
        %s52 = sadd.s32 1, %s48
      $region39: #{tpu_custom_call.1} parent=32 // loop_footer_branch
        %47 = sbr.rel target = $region35
      $region40: #{tpu_custom_call.1} parent=32 // loop_exit
        _
    $region33: #{tpu_custom_call.1} parent=1 // pred_fallthru
      _
    // Predicated region
    $region52: #{tpu_custom_call.1} parent=1 // pred_check
      _
    $region53: #{tpu_custom_call.1} parent=1 // pred_check_branch
      %80 = sbr.rel (0) target = $region55
    $region54: #{tpu_custom_call.1} parent=1 // pred_region
      %81 = vsyncadd [#allocation3], 16
    $region55: #{tpu_custom_call.1} parent=1 // pred_fallthru
      _
    %s82 = sld [smem:[#allocation4 + $0x1]]
    %s83 = scalar_lea.vmem %s2, %s82
    %s84 = scalar_lea.vmem [#allocation2], 1
    %s85 = scalar_lea.sflag [#allocation3], 1
    %p87 = scmp.lt.u32.totalorder 1, 8
    %p88 = pneg %p87
    // Predicated region
    $region56: #{tpu_custom_call.1} parent=1 // pred_check
      _
    $region57: #{tpu_custom_call.1} parent=1 // pred_check_branch
      %90 = sbr.rel (%p87) target = $region59
    $region58: #{tpu_custom_call.1} parent=1 // pred_region
      %s105 = sand.u32 1, 7
      %p106 = scmp.eq.s32.totalorder %s105, 0
      %p107 = pneg %p106
      // Predicated region
      $region71: #{tpu_custom_call.1} parent=58 // pred_check
        _
      $region72: #{tpu_custom_call.1} parent=58 // pred_check_branch
        %109 = sbr.rel (%p106) target = $region74
      $region73: #{tpu_custom_call.1} parent=58 // pred_region
        %s110 = sand.u32 1, 7
        %s111 = ssub.s32 1, %s110
        %s112 = scalar_lea.vmem %s83, %s111
        %s113 = ssub.s32 1, %s110
        %s114 = scalar_lea.vmem %s84, %s113 [#allocation2]
        %s115 = sshllo.u32 0, %s110
        loop: start=0, step=1, limit=1
        $region75: #{tpu_custom_call.1} parent=73 // loop_pre_header
          _
        $region76: #{tpu_custom_call.1} parent=73 // loop_header
          %s117 = sphi 0, %s121
          %p118 = scmp.ge.s32.totalorder %s117, 1
          %s122 = sphi %s112, %s112
          %s123 = sphi %s114, %s114
        $region77: #{tpu_custom_call.1} parent=73 // loop_header_branch
          %120 = sbr.rel (%p118) target = $region81
        $region78: #{tpu_custom_call.1} parent=73 // loop_body
          %v124 = vld [vmem:[%s122] sm:%s115]
          %125 = vst [vmem:[%s123] sm:%s115] %v124
        $region79: #{tpu_custom_call.1} parent=73 // loop_footer
          %s121 = sadd.s32 1, %s117
        $region80: #{tpu_custom_call.1} parent=73 // loop_footer_branch
          %116 = sbr.rel target = $region76
        $region81: #{tpu_custom_call.1} parent=73 // loop_exit
          _
      $region74: #{tpu_custom_call.1} parent=58 // pred_fallthru
        _
    $region59: #{tpu_custom_call.1} parent=1 // pred_fallthru
      _
    // Predicated region
    $region60: #{tpu_custom_call.1} parent=1 // pred_check
      %p91 = pneg %p87
    $region61: #{tpu_custom_call.1} parent=1 // pred_check_branch
      %93 = sbr.rel (%p91) target = $region63
    $region62: #{tpu_custom_call.1} parent=1 // pred_region
      %s94 = sshllo.u32 0, 1
      loop: start=0, step=1, limit=1
      $region64: #{tpu_custom_call.1} parent=62 // loop_pre_header
        _
      $region65: #{tpu_custom_call.1} parent=62 // loop_header
        %s96 = sphi 0, %s100
        %p97 = scmp.ge.s32.totalorder %s96, 1
        %s101 = sphi %s83, %s83
        %s102 = sphi %s84, %s84
      $region66: #{tpu_custom_call.1} parent=62 // loop_header_branch
        %99 = sbr.rel (%p97) target = $region70
      $region67: #{tpu_custom_call.1} parent=62 // loop_body
        %v103 = vld [vmem:[%s101] sm:%s94]
        %104 = vst [vmem:[%s102] sm:%s94] %v103
      $region68: #{tpu_custom_call.1} parent=62 // loop_footer
        %s100 = sadd.s32 1, %s96
      $region69: #{tpu_custom_call.1} parent=62 // loop_footer_branch
        %95 = sbr.rel target = $region65
      $region70: #{tpu_custom_call.1} parent=62 // loop_exit
        _
    $region63: #{tpu_custom_call.1} parent=1 // pred_fallthru
      _
    // Predicated region
    $region82: #{tpu_custom_call.1} parent=1 // pred_check
      _
    $region83: #{tpu_custom_call.1} parent=1 // pred_check_branch
      %128 = sbr.rel (0) target = $region85
    $region84: #{tpu_custom_call.1} parent=1 // pred_region
      %129 = vsyncadd %s85, 16
    $region85: #{tpu_custom_call.1} parent=1 // pred_fallthru
      _
    %s130 = sld [smem:[#allocation4 + $0x2]]
    %s131 = scalar_lea.vmem %s2, %s130
    %s132 = scalar_lea.vmem [#allocation2], 2
    %s133 = scalar_lea.sflag [#allocation3], 2
    %p135 = scmp.lt.u32.totalorder 1, 8
    %p136 = pneg %p135
    // Predicated region
    $region86: #{tpu_custom_call.1} parent=1 // pred_check
      _
    $region87: #{tpu_custom_call.1} parent=1 // pred_check_branch
      %138 = sbr.rel (%p135) target = $region89
    $region88: #{tpu_custom_call.1} parent=1 // pred_region
      %s153 = sand.u32 1, 7
      %p154 = scmp.eq.s32.totalorder %s153, 0
      %p155 = pneg %p154
      // Predicated region
      $region101: #{tpu_custom_call.1} parent=88 // pred_check
        _
      $region102: #{tpu_custom_call.1} parent=88 // pred_check_branch
        %157 = sbr.rel (%p154) target = $region104
      $region103: #{tpu_custom_call.1} parent=88 // pred_region
        %s158 = sand.u32 1, 7
        %s159 = ssub.s32 1, %s158
        %s160 = scalar_lea.vmem %s131, %s159
        %s161 = ssub.s32 1, %s158
        %s162 = scalar_lea.vmem %s132, %s161 [#allocation2]
        %s163 = sshllo.u32 0, %s158
        loop: start=0, step=1, limit=1
        $region105: #{tpu_custom_call.1} parent=103 // loop_pre_header
          _
        $region106: #{tpu_custom_call.1} parent=103 // loop_header
          %s165 = sphi 0, %s169
          %p166 = scmp.ge.s32.totalorder %s165, 1
          %s170 = sphi %s160, %s160
          %s171 = sphi %s162, %s162
        $region107: #{tpu_custom_call.1} parent=103 // loop_header_branch
          %168 = sbr.rel (%p166) target = $region111
        $region108: #{tpu_custom_call.1} parent=103 // loop_body
          %v172 = vld [vmem:[%s170] sm:%s163]
          %173 = vst [vmem:[%s171] sm:%s163] %v172
        $region109: #{tpu_custom_call.1} parent=103 // loop_footer
          %s169 = sadd.s32 1, %s165
        $region110: #{tpu_custom_call.1} parent=103 // loop_footer_branch
          %164 = sbr.rel target = $region106
        $region111: #{tpu_custom_call.1} parent=103 // loop_exit
          _
      $region104: #{tpu_custom_call.1} parent=88 // pred_fallthru
        _
    $region89: #{tpu_custom_call.1} parent=1 // pred_fallthru
      _
    // Predicated region
    $region90: #{tpu_custom_call.1} parent=1 // pred_check
      %p139 = pneg %p135
    $region91: #{tpu_custom_call.1} parent=1 // pred_check_branch
      %141 = sbr.rel (%p139) target = $region93
    $region92: #{tpu_custom_call.1} parent=1 // pred_region
      %s142 = sshllo.u32 0, 1
      loop: start=0, step=1, limit=1
      $region94: #{tpu_custom_call.1} parent=92 // loop_pre_header
        _
      $region95: #{tpu_custom_call.1} parent=92 // loop_header
        %s144 = sphi 0, %s148
        %p145 = scmp.ge.s32.totalorder %s144, 1
        %s149 = sphi %s131, %s131
        %s150 = sphi %s132, %s132
      $region96: #{tpu_custom_call.1} parent=92 // loop_header_branch
        %147 = sbr.rel (%p145) target = $region100
      $region97: #{tpu_custom_call.1} parent=92 // loop_body
        %v151 = vld [vmem:[%s149] sm:%s142]
        %152 = vst [vmem:[%s150] sm:%s142] %v151
      $region98: #{tpu_custom_call.1} parent=92 // loop_footer
        %s148 = sadd.s32 1, %s144
      $region99: #{tpu_custom_call.1} parent=92 // loop_footer_branch
        %143 = sbr.rel target = $region95
      $region100: #{tpu_custom_call.1} parent=92 // loop_exit
        _
    $region93: #{tpu_custom_call.1} parent=1 // pred_fallthru
      _
    // Predicated region
    $region112: #{tpu_custom_call.1} parent=1 // pred_check
      _
    $region113: #{tpu_custom_call.1} parent=1 // pred_check_branch
      %176 = sbr.rel (0) target = $region115
    $region114: #{tpu_custom_call.1} parent=1 // pred_region
      %177 = vsyncadd %s133, 16
    $region115: #{tpu_custom_call.1} parent=1 // pred_fallthru
      _
    %s178 = sld [smem:[#allocation4 + $0x3]]
    %s179 = scalar_lea.vmem %s2, %s178
    %s180 = scalar_lea.vmem [#allocation2], 3
    %s181 = scalar_lea.sflag [#allocation3], 3
    %p183 = scmp.lt.u32.totalorder 1, 8
    %p184 = pneg %p183
    // Predicated region
    $region116: #{tpu_custom_call.1} parent=1 // pred_check
      _
    $region117: #{tpu_custom_call.1} parent=1 // pred_check_branch
      %186 = sbr.rel (%p183) target = $region119
    $region118: #{tpu_custom_call.1} parent=1 // pred_region
      %s201 = sand.u32 1, 7
      %p202 = scmp.eq.s32.totalorder %s201, 0
      %p203 = pneg %p202
      // Predicated region
      $region131: #{tpu_custom_call.1} parent=118 // pred_check
        _
      $region132: #{tpu_custom_call.1} parent=118 // pred_check_branch
        %205 = sbr.rel (%p202) target = $region134
      $region133: #{tpu_custom_call.1} parent=118 // pred_region
        %s206 = sand.u32 1, 7
        %s207 = ssub.s32 1, %s206
        %s208 = scalar_lea.vmem %s179, %s207
        %s209 = ssub.s32 1, %s206
        %s210 = scalar_lea.vmem %s180, %s209 [#allocation2]
        %s211 = sshllo.u32 0, %s206
        loop: start=0, step=1, limit=1
        $region135: #{tpu_custom_call.1} parent=133 // loop_pre_header
          _
        $region136: #{tpu_custom_call.1} parent=133 // loop_header
          %s213 = sphi 0, %s217
          %p214 = scmp.ge.s32.totalorder %s213, 1
          %s218 = sphi %s208, %s208
          %s219 = sphi %s210, %s210
        $region137: #{tpu_custom_call.1} parent=133 // loop_header_branch
          %216 = sbr.rel (%p214) target = $region141
        $region138: #{tpu_custom_call.1} parent=133 // loop_body
          %v220 = vld [vmem:[%s218] sm:%s211]
          %221 = vst [vmem:[%s219] sm:%s211] %v220
        $region139: #{tpu_custom_call.1} parent=133 // loop_footer
          %s217 = sadd.s32 1, %s213
        $region140: #{tpu_custom_call.1} parent=133 // loop_footer_branch
          %212 = sbr.rel target = $region136
        $region141: #{tpu_custom_call.1} parent=133 // loop_exit
          _
      $region134: #{tpu_custom_call.1} parent=118 // pred_fallthru
        _
    $region119: #{tpu_custom_call.1} parent=1 // pred_fallthru
      _
    // Predicated region
    $region120: #{tpu_custom_call.1} parent=1 // pred_check
      %p187 = pneg %p183
    $region121: #{tpu_custom_call.1} parent=1 // pred_check_branch
      %189 = sbr.rel (%p187) target = $region123
    $region122: #{tpu_custom_call.1} parent=1 // pred_region
      %s190 = sshllo.u32 0, 1
      loop: start=0, step=1, limit=1
      $region124: #{tpu_custom_call.1} parent=122 // loop_pre_header
        _
      $region125: #{tpu_custom_call.1} parent=122 // loop_header
        %s192 = sphi 0, %s196
        %p193 = scmp.ge.s32.totalorder %s192, 1
        %s197 = sphi %s179, %s179
        %s198 = sphi %s180, %s180
      $region126: #{tpu_custom_call.1} parent=122 // loop_header_branch
        %195 = sbr.rel (%p193) target = $region130
      $region127: #{tpu_custom_call.1} parent=122 // loop_body
        %v199 = vld [vmem:[%s197] sm:%s190]
        %200 = vst [vmem:[%s198] sm:%s190] %v199
      $region128: #{tpu_custom_call.1} parent=122 // loop_footer
        %s196 = sadd.s32 1, %s192
      $region129: #{tpu_custom_call.1} parent=122 // loop_footer_branch
        %191 = sbr.rel target = $region125
      $region130: #{tpu_custom_call.1} parent=122 // loop_exit
        _
    $region123: #{tpu_custom_call.1} parent=1 // pred_fallthru
      _
    // Predicated region
    $region142: #{tpu_custom_call.1} parent=1 // pred_check
      _
    $region143: #{tpu_custom_call.1} parent=1 // pred_check_branch
      %224 = sbr.rel (0) target = $region145
    $region144: #{tpu_custom_call.1} parent=1 // pred_region
      %225 = vsyncadd %s181, 16
    $region145: #{tpu_custom_call.1} parent=1 // pred_fallthru
      _
    %s226 = sld [smem:[#allocation4 + $0x4]]
    %s227 = scalar_lea.vmem %s2, %s226
    %s228 = scalar_lea.vmem [#allocation2], 4
    %s229 = scalar_lea.sflag [#allocation3], 4
    %p231 = scmp.lt.u32.totalorder 1, 8
    %p232 = pneg %p231
    // Predicated region
    $region146: #{tpu_custom_call.1} parent=1 // pred_check
      _
    $region147: #{tpu_custom_call.1} parent=1 // pred_check_branch
      %234 = sbr.rel (%p231) target = $region149
    $region148: #{tpu_custom_call.1} parent=1 // pred_region
      %s249 = sand.u32 1, 7
      %p250 = scmp.eq.s32.totalorder %s249, 0
      %p251 = pneg %p250
      // Predicated region
      $region161: #{tpu_custom_call.1} parent=148 // pred_check
        _
      $region162: #{tpu_custom_call.1} parent=148 // pred_check_branch
        %253 = sbr.rel (%p250) target = $region164
      $region163: #{tpu_custom_call.1} parent=148 // pred_region
        %s254 = sand.u32 1, 7
        %s255 = ssub.s32 1, %s254
        %s256 = scalar_lea.vmem %s227, %s255
        %s257 = ssub.s32 1, %s254
        %s258 = scalar_lea.vmem %s228, %s257 [#allocation2]
        %s259 = sshllo.u32 0, %s254
        loop: start=0, step=1, limit=1
        $region165: #{tpu_custom_call.1} parent=163 // loop_pre_header
          _
        $region166: #{tpu_custom_call.1} parent=163 // loop_header
          %s261 = sphi 0, %s265
          %p262 = scmp.ge.s32.totalorder %s261, 1
          %s266 = sphi %s256, %s256
          %s267 = sphi %s258, %s258
        $region167: #{tpu_custom_call.1} parent=163 // loop_header_branch
          %264 = sbr.rel (%p262) target = $region171
        $region168: #{tpu_custom_call.1} parent=163 // loop_body
          %v268 = vld [vmem:[%s266] sm:%s259]
          %269 = vst [vmem:[%s267] sm:%s259] %v268
        $region169: #{tpu_custom_call.1} parent=163 // loop_footer
          %s265 = sadd.s32 1, %s261
        $region170: #{tpu_custom_call.1} parent=163 // loop_footer_branch
          %260 = sbr.rel target = $region166
        $region171: #{tpu_custom_call.1} parent=163 // loop_exit
          _
      $region164: #{tpu_custom_call.1} parent=148 // pred_fallthru
        _
    $region149: #{tpu_custom_call.1} parent=1 // pred_fallthru
      _
    // Predicated region
    $region150: #{tpu_custom_call.1} parent=1 // pred_check
      %p235 = pneg %p231
    $region151: #{tpu_custom_call.1} parent=1 // pred_check_branch
      %237 = sbr.rel (%p235) target = $region153
    $region152: #{tpu_custom_call.1} parent=1 // pred_region
      %s238 = sshllo.u32 0, 1
      loop: start=0, step=1, limit=1
      $region154: #{tpu_custom_call.1} parent=152 // loop_pre_header
        _
      $region155: #{tpu_custom_call.1} parent=152 // loop_header
        %s240 = sphi 0, %s244
        %p241 = scmp.ge.s32.totalorder %s240, 1
        %s245 = sphi %s227, %s227
        %s246 = sphi %s228, %s228
      $region156: #{tpu_custom_call.1} parent=152 // loop_header_branch
        %243 = sbr.rel (%p241) target = $region160
      $region157: #{tpu_custom_call.1} parent=152 // loop_body
        %v247 = vld [vmem:[%s245] sm:%s238]
        %248 = vst [vmem:[%s246] sm:%s238] %v247
      $region158: #{tpu_custom_call.1} parent=152 // loop_footer
        %s244 = sadd.s32 1, %s240
      $region159: #{tpu_custom_call.1} parent=152 // loop_footer_branch
        %239 = sbr.rel target = $region155
      $region160: #{tpu_custom_call.1} parent=152 // loop_exit
        _
    $region153: #{tpu_custom_call.1} parent=1 // pred_fallthru
      _
    // Predicated region
    $region172: #{tpu_custom_call.1} parent=1 // pred_check
      _
    $region173: #{tpu_custom_call.1} parent=1 // pred_check_branch
      %272 = sbr.rel (0) target = $region175
    $region174: #{tpu_custom_call.1} parent=1 // pred_region
      %273 = vsyncadd %s229, 16
    $region175: #{tpu_custom_call.1} parent=1 // pred_fallthru
      _
    %s274 = sld [smem:[#allocation4 + $0x5]]
    %s275 = scalar_lea.vmem %s2, %s274
    %s276 = scalar_lea.vmem [#allocation2], 5
    %s277 = scalar_lea.sflag [#allocation3], 5
    %p279 = scmp.lt.u32.totalorder 1, 8
    %p280 = pneg %p279
    // Predicated region
    $region176: #{tpu_custom_call.1} parent=1 // pred_check
      _
    $region177: #{tpu_custom_call.1} parent=1 // pred_check_branch
      %282 = sbr.rel (%p279) target = $region179
    $region178: #{tpu_custom_call.1} parent=1 // pred_region
      %s297 = sand.u32 1, 7
      %p298 = scmp.eq.s32.totalorder %s297, 0
      %p299 = pneg %p298
      // Predicated region
      $region191: #{tpu_custom_call.1} parent=178 // pred_check
        _
      $region192: #{tpu_custom_call.1} parent=178 // pred_check_branch
        %301 = sbr.rel (%p298) target = $region194
      $region193: #{tpu_custom_call.1} parent=178 // pred_region
        %s302 = sand.u32 1, 7
        %s303 = ssub.s32 1, %s302
        %s304 = scalar_lea.vmem %s275, %s303
        %s305 = ssub.s32 1, %s302
        %s306 = scalar_lea.vmem %s276, %s305 [#allocation2]
        %s307 = sshllo.u32 0, %s302
        loop: start=0, step=1, limit=1
        $region195: #{tpu_custom_call.1} parent=193 // loop_pre_header
          _
        $region196: #{tpu_custom_call.1} parent=193 // loop_header
          %s309 = sphi 0, %s313
          %p310 = scmp.ge.s32.totalorder %s309, 1
          %s314 = sphi %s304, %s304
          %s315 = sphi %s306, %s306
        $region197: #{tpu_custom_call.1} parent=193 // loop_header_branch
          %312 = sbr.rel (%p310) target = $region201
        $region198: #{tpu_custom_call.1} parent=193 // loop_body
          %v316 = vld [vmem:[%s314] sm:%s307]
          %317 = vst [vmem:[%s315] sm:%s307] %v316
        $region199: #{tpu_custom_call.1} parent=193 // loop_footer
          %s313 = sadd.s32 1, %s309
        $region200: #{tpu_custom_call.1} parent=193 // loop_footer_branch
          %308 = sbr.rel target = $region196
        $region201: #{tpu_custom_call.1} parent=193 // loop_exit
          _
      $region194: #{tpu_custom_call.1} parent=178 // pred_fallthru
        _
    $region179: #{tpu_custom_call.1} parent=1 // pred_fallthru
      _
    // Predicated region
    $region180: #{tpu_custom_call.1} parent=1 // pred_check
      %p283 = pneg %p279
    $region181: #{tpu_custom_call.1} parent=1 // pred_check_branch
      %285 = sbr.rel (%p283) target = $region183
    $region182: #{tpu_custom_call.1} parent=1 // pred_region
      %s286 = sshllo.u32 0, 1
      loop: start=0, step=1, limit=1
      $region184: #{tpu_custom_call.1} parent=182 // loop_pre_header
        _
      $region185: #{tpu_custom_call.1} parent=182 // loop_header
        %s288 = sphi 0, %s292
        %p289 = scmp.ge.s32.totalorder %s288, 1
        %s293 = sphi %s275, %s275
        %s294 = sphi %s276, %s276
      $region186: #{tpu_custom_call.1} parent=182 // loop_header_branch
        %291 = sbr.rel (%p289) target = $region190
      $region187: #{tpu_custom_call.1} parent=182 // loop_body
        %v295 = vld [vmem:[%s293] sm:%s286]
        %296 = vst [vmem:[%s294] sm:%s286] %v295
      $region188: #{tpu_custom_call.1} parent=182 // loop_footer
        %s292 = sadd.s32 1, %s288
      $region189: #{tpu_custom_call.1} parent=182 // loop_footer_branch
        %287 = sbr.rel target = $region185
      $region190: #{tpu_custom_call.1} parent=182 // loop_exit
        _
    $region183: #{tpu_custom_call.1} parent=1 // pred_fallthru
      _
    // Predicated region
    $region202: #{tpu_custom_call.1} parent=1 // pred_check
      _
    $region203: #{tpu_custom_call.1} parent=1 // pred_check_branch
      %320 = sbr.rel (0) target = $region205
    $region204: #{tpu_custom_call.1} parent=1 // pred_region
      %321 = vsyncadd %s277, 16
    $region205: #{tpu_custom_call.1} parent=1 // pred_fallthru
      _
    %s322 = sld [smem:[#allocation4 + $0x6]]
    %s323 = scalar_lea.vmem %s2, %s322
    %s324 = scalar_lea.vmem [#allocation2], 6
    %s325 = scalar_lea.sflag [#allocation3], 6
    %p327 = scmp.lt.u32.totalorder 1, 8
    %p328 = pneg %p327
    // Predicated region
    $region206: #{tpu_custom_call.1} parent=1 // pred_check
      _
    $region207: #{tpu_custom_call.1} parent=1 // pred_check_branch
      %330 = sbr.rel (%p327) target = $region209
    $region208: #{tpu_custom_call.1} parent=1 // pred_region
      %s345 = sand.u32 1, 7
      %p346 = scmp.eq.s32.totalorder %s345, 0
      %p347 = pneg %p346
      // Predicated region
      $region221: #{tpu_custom_call.1} parent=208 // pred_check
        _
      $region222: #{tpu_custom_call.1} parent=208 // pred_check_branch
        %349 = sbr.rel (%p346) target = $region224
      $region223: #{tpu_custom_call.1} parent=208 // pred_region
        %s350 = sand.u32 1, 7
        %s351 = ssub.s32 1, %s350
        %s352 = scalar_lea.vmem %s323, %s351
        %s353 = ssub.s32 1, %s350
        %s354 = scalar_lea.vmem %s324, %s353 [#allocation2]
        %s355 = sshllo.u32 0, %s350
        loop: start=0, step=1, limit=1
        $region225: #{tpu_custom_call.1} parent=223 // loop_pre_header
          _
        $region226: #{tpu_custom_call.1} parent=223 // loop_header
          %s357 = sphi 0, %s361
          %p358 = scmp.ge.s32.totalorder %s357, 1
          %s362 = sphi %s352, %s352
          %s363 = sphi %s354, %s354
        $region227: #{tpu_custom_call.1} parent=223 // loop_header_branch
          %360 = sbr.rel (%p358) target = $region231
        $region228: #{tpu_custom_call.1} parent=223 // loop_body
          %v364 = vld [vmem:[%s362] sm:%s355]
          %365 = vst [vmem:[%s363] sm:%s355] %v364
        $region229: #{tpu_custom_call.1} parent=223 // loop_footer
          %s361 = sadd.s32 1, %s357
        $region230: #{tpu_custom_call.1} parent=223 // loop_footer_branch
          %356 = sbr.rel target = $region226
        $region231: #{tpu_custom_call.1} parent=223 // loop_exit
          _
      $region224: #{tpu_custom_call.1} parent=208 // pred_fallthru
        _
    $region209: #{tpu_custom_call.1} parent=1 // pred_fallthru
      _
    // Predicated region
    $region210: #{tpu_custom_call.1} parent=1 // pred_check
      %p331 = pneg %p327
    $region211: #{tpu_custom_call.1} parent=1 // pred_check_branch
      %333 = sbr.rel (%p331) target = $region213
    $region212: #{tpu_custom_call.1} parent=1 // pred_region
      %s334 = sshllo.u32 0, 1
      loop: start=0, step=1, limit=1
      $region214: #{tpu_custom_call.1} parent=212 // loop_pre_header
        _
      $region215: #{tpu_custom_call.1} parent=212 // loop_header
        %s336 = sphi 0, %s340
        %p337 = scmp.ge.s32.totalorder %s336, 1
        %s341 = sphi %s323, %s323
        %s342 = sphi %s324, %s324
      $region216: #{tpu_custom_call.1} parent=212 // loop_header_branch
        %339 = sbr.rel (%p337) target = $region220
      $region217: #{tpu_custom_call.1} parent=212 // loop_body
        %v343 = vld [vmem:[%s341] sm:%s334]
        %344 = vst [vmem:[%s342] sm:%s334] %v343
      $region218: #{tpu_custom_call.1} parent=212 // loop_footer
        %s340 = sadd.s32 1, %s336
      $region219: #{tpu_custom_call.1} parent=212 // loop_footer_branch
        %335 = sbr.rel target = $region215
      $region220: #{tpu_custom_call.1} parent=212 // loop_exit
        _
    $region213: #{tpu_custom_call.1} parent=1 // pred_fallthru
      _
    // Predicated region
    $region232: #{tpu_custom_call.1} parent=1 // pred_check
      _
    $region233: #{tpu_custom_call.1} parent=1 // pred_check_branch
      %368 = sbr.rel (0) target = $region235
    $region234: #{tpu_custom_call.1} parent=1 // pred_region
      %369 = vsyncadd %s325, 16
    $region235: #{tpu_custom_call.1} parent=1 // pred_fallthru
      _
    %s370 = sld [smem:[#allocation4 + $0x7]]
    %s371 = scalar_lea.vmem %s2, %s370
    %s372 = scalar_lea.vmem [#allocation2], 7
    %s373 = scalar_lea.sflag [#allocation3], 7
    %p375 = scmp.lt.u32.totalorder 1, 8
    %p376 = pneg %p375
    // Predicated region
    $region236: #{tpu_custom_call.1} parent=1 // pred_check
      _
    $region237: #{tpu_custom_call.1} parent=1 // pred_check_branch
      %378 = sbr.rel (%p375) target = $region239
    $region238: #{tpu_custom_call.1} parent=1 // pred_region
      %s393 = sand.u32 1, 7
      %p394 = scmp.eq.s32.totalorder %s393, 0
      %p395 = pneg %p394
      // Predicated region
      $region251: #{tpu_custom_call.1} parent=238 // pred_check
        _
      $region252: #{tpu_custom_call.1} parent=238 // pred_check_branch
        %397 = sbr.rel (%p394) target = $region254
      $region253: #{tpu_custom_call.1} parent=238 // pred_region
        %s398 = sand.u32 1, 7
        %s399 = ssub.s32 1, %s398
        %s400 = scalar_lea.vmem %s371, %s399
        %s401 = ssub.s32 1, %s398
        %s402 = scalar_lea.vmem %s372, %s401 [#allocation2]
        %s403 = sshllo.u32 0, %s398
        loop: start=0, step=1, limit=1
        $region255: #{tpu_custom_call.1} parent=253 // loop_pre_header
          _
        $region256: #{tpu_custom_call.1} parent=253 // loop_header
          %s405 = sphi 0, %s409
          %p406 = scmp.ge.s32.totalorder %s405, 1
          %s410 = sphi %s400, %s400
          %s411 = sphi %s402, %s402
        $region257: #{tpu_custom_call.1} parent=253 // loop_header_branch
          %408 = sbr.rel (%p406) target = $region261
        $region258: #{tpu_custom_call.1} parent=253 // loop_body
          %v412 = vld [vmem:[%s410] sm:%s403]
          %413 = vst [vmem:[%s411] sm:%s403] %v412
        $region259: #{tpu_custom_call.1} parent=253 // loop_footer
          %s409 = sadd.s32 1, %s405
        $region260: #{tpu_custom_call.1} parent=253 // loop_footer_branch
          %404 = sbr.rel target = $region256
        $region261: #{tpu_custom_call.1} parent=253 // loop_exit
          _
      $region254: #{tpu_custom_call.1} parent=238 // pred_fallthru
        _
    $region239: #{tpu_custom_call.1} parent=1 // pred_fallthru
      _
    // Predicated region
    $region240: #{tpu_custom_call.1} parent=1 // pred_check
      %p379 = pneg %p375
    $region241: #{tpu_custom_call.1} parent=1 // pred_check_branch
      %381 = sbr.rel (%p379) target = $region243
    $region242: #{tpu_custom_call.1} parent=1 // pred_region
      %s382 = sshllo.u32 0, 1
      loop: start=0, step=1, limit=1
      $region244: #{tpu_custom_call.1} parent=242 // loop_pre_header
        _
      $region245: #{tpu_custom_call.1} parent=242 // loop_header
        %s384 = sphi 0, %s388
        %p385 = scmp.ge.s32.totalorder %s384, 1
        %s389 = sphi %s371, %s371
        %s390 = sphi %s372, %s372
      $region246: #{tpu_custom_call.1} parent=242 // loop_header_branch
        %387 = sbr.rel (%p385) target = $region250
      $region247: #{tpu_custom_call.1} parent=242 // loop_body
        %v391 = vld [vmem:[%s389] sm:%s382]
        %392 = vst [vmem:[%s390] sm:%s382] %v391
      $region248: #{tpu_custom_call.1} parent=242 // loop_footer
        %s388 = sadd.s32 1, %s384
      $region249: #{tpu_custom_call.1} parent=242 // loop_footer_branch
        %383 = sbr.rel target = $region245
      $region250: #{tpu_custom_call.1} parent=242 // loop_exit
        _
    $region243: #{tpu_custom_call.1} parent=1 // pred_fallthru
      _
    // Predicated region
    $region262: #{tpu_custom_call.1} parent=1 // pred_check
      _
    $region263: #{tpu_custom_call.1} parent=1 // pred_check_branch
      %416 = sbr.rel (0) target = $region265
    $region264: #{tpu_custom_call.1} parent=1 // pred_region
      %417 = vsyncadd %s373, 16
    $region265: #{tpu_custom_call.1} parent=1 // pred_fallthru
      _
    %v418 = vld [vmem:[%s1] sm:$0xff]
    %v419 = vlaneseq
    %v420 = vand.u32 %v419, 127
    %421 = vset.pattern.permute.xlu0 0
    %422 = vperm.xlu0 %421, %v418
    %v423 = vpop.permute.xlu0 %422
    %vm424 = vcmp.ge.s32.totalorder %v420, %v423
    %425 = vset.pattern.permute.xlu0 1
    %426 = vperm.xlu0 %425, %v418
    %v427 = vpop.permute.xlu0 %426
    %vm428 = vcmp.lt.s32.totalorder %v420, %v427
    %vm429 = vmand %vm424, %vm428
    %v430 = vsel %vm429, 1, 0
    %v431 = vcvt.s32.f32 %v430
    %v432 = vpack.c.bf16 %v431, %v431
    %433 = vrot.lane.b32.xlu0 %v418, 1
    %v434 = vpop.permute.xlu0 %433
    %v435 = vsub.s32 %v418, %v434
    %v436 = vcvt.s32.f32 %v435
    %v437 = vmax.f32 %v436, 1.0
    %v438 = vrcp.pop %v437
    %v439 = vmul.f32 1.0, %v438
    loop: start=0, step=1, limit=64
    $region266: #{tpu_custom_call.1} parent=1 // loop_pre_header
      _
    $region267: #{tpu_custom_call.1} parent=1 // loop_header
      %s441 = sphi 0, %s445
      %p442 = scmp.ge.s32.totalorder %s441, 64
    $region268: #{tpu_custom_call.1} parent=1 // loop_header_branch
      %444 = sbr.rel (%p442) target = $region272
    $region269: #{tpu_custom_call.1} parent=1 // loop_body
      %p446 = scmp.lt.s32.totalorder %s441, 0
      %s447 = ssub.s32 0, %s441
      %s448 = scalar_select %p446, %s447, %s441
      %s449 = sand.u32 %s448, 7
      %s450 = ssub.s32 0, %s449
      %s451 = scalar_select %p446, %s450, %s449
      %p452 = scmp.ne.s32.totalorder %s451, 0
      %p453 = scmp.lt.s32.totalorder %s451, 0
      %p454 = pnand %p453, %p452
      %p455 = pneg %p454
      %s456 = sadd.s32 %s451, 8
      %s457 = scalar_select %p455, %s456, %s451
      %s458 = sld [smem:[#allocation4 + %s441]]
      %s459 = scalar_lea.sflag [#allocation3], %s457
      %s460 = smul.u32 1, 1
      %s461 = sshll.u32 %s460, 4
      %462 = dma.done %s459, %s461
      %s463 = sadd.s32 %s441, 8
      %p464 = scmp.lt.s32.totalorder %s463, 64
      // Predicated region
      $region273: #{tpu_custom_call.1} parent=269 // pred_check
        %p465 = pneg %p464
      $region274: #{tpu_custom_call.1} parent=269 // pred_check_branch
        %467 = sbr.rel (%p465) target = $region276
      $region275: #{tpu_custom_call.1} parent=269 // pred_region
        %s468 = sld [smem:[#allocation4 + %s463]]
        %s469 = scalar_lea.vmem %s2, %s468
        %s470 = scalar_lea.vmem [#allocation2], %s463
        %p472 = scmp.lt.u32.totalorder 1, 8
        %p473 = pneg %p472
        // Predicated region
        $region277: #{tpu_custom_call.1} parent=275 // pred_check
          _
        $region278: #{tpu_custom_call.1} parent=275 // pred_check_branch
          %475 = sbr.rel (%p472) target = $region280
        $region279: #{tpu_custom_call.1} parent=275 // pred_region
          %s490 = sand.u32 1, 7
          %p491 = scmp.eq.s32.totalorder %s490, 0
          %p492 = pneg %p491
          // Predicated region
          $region292: #{tpu_custom_call.1} parent=279 // pred_check
            _
          $region293: #{tpu_custom_call.1} parent=279 // pred_check_branch
            %494 = sbr.rel (%p491) target = $region295
          $region294: #{tpu_custom_call.1} parent=279 // pred_region
            %s495 = sand.u32 1, 7
            %s496 = ssub.s32 1, %s495
            %s497 = scalar_lea.vmem %s469, %s496
            %s498 = ssub.s32 1, %s495
            %s499 = scalar_lea.vmem %s470, %s498 [#allocation2]
            %s500 = sshllo.u32 0, %s495
            loop: start=0, step=1, limit=1
            $region296: #{tpu_custom_call.1} parent=294 // loop_pre_header
              _
            $region297: #{tpu_custom_call.1} parent=294 // loop_header
              %s502 = sphi 0, %s506
              %p503 = scmp.ge.s32.totalorder %s502, 1
              %s507 = sphi %s497, %s497
              %s508 = sphi %s499, %s499
            $region298: #{tpu_custom_call.1} parent=294 // loop_header_branch
              %505 = sbr.rel (%p503) target = $region302
            $region299: #{tpu_custom_call.1} parent=294 // loop_body
              %v509 = vld [vmem:[%s507] sm:%s500]
              %510 = vst [vmem:[%s508] sm:%s500] %v509
            $region300: #{tpu_custom_call.1} parent=294 // loop_footer
              %s506 = sadd.s32 1, %s502
            $region301: #{tpu_custom_call.1} parent=294 // loop_footer_branch
              %501 = sbr.rel target = $region297
            $region302: #{tpu_custom_call.1} parent=294 // loop_exit
              _
          $region295: #{tpu_custom_call.1} parent=279 // pred_fallthru
            _
        $region280: #{tpu_custom_call.1} parent=275 // pred_fallthru
          _
        // Predicated region
        $region281: #{tpu_custom_call.1} parent=275 // pred_check
          %p476 = pneg %p472
        $region282: #{tpu_custom_call.1} parent=275 // pred_check_branch
          %478 = sbr.rel (%p476) target = $region284
        $region283: #{tpu_custom_call.1} parent=275 // pred_region
          %s479 = sshllo.u32 0, 1
          loop: start=0, step=1, limit=1
          $region285: #{tpu_custom_call.1} parent=283 // loop_pre_header
            _
          $region286: #{tpu_custom_call.1} parent=283 // loop_header
            %s481 = sphi 0, %s485
            %p482 = scmp.ge.s32.totalorder %s481, 1
            %s486 = sphi %s469, %s469
            %s487 = sphi %s470, %s470
          $region287: #{tpu_custom_call.1} parent=283 // loop_header_branch
            %484 = sbr.rel (%p482) target = $region291
          $region288: #{tpu_custom_call.1} parent=283 // loop_body
            %v488 = vld [vmem:[%s486] sm:%s479]
            %489 = vst [vmem:[%s487] sm:%s479] %v488
          $region289: #{tpu_custom_call.1} parent=283 // loop_footer
            %s485 = sadd.s32 1, %s481
          $region290: #{tpu_custom_call.1} parent=283 // loop_footer_branch
            %480 = sbr.rel target = $region286
          $region291: #{tpu_custom_call.1} parent=283 // loop_exit
            _
        $region284: #{tpu_custom_call.1} parent=275 // pred_fallthru
          _
        // Predicated region
        $region303: #{tpu_custom_call.1} parent=275 // pred_check
          _
        $region304: #{tpu_custom_call.1} parent=275 // pred_check_branch
          %513 = sbr.rel (0) target = $region306
        $region305: #{tpu_custom_call.1} parent=275 // pred_region
          %514 = vsyncadd %s459, 16
        $region306: #{tpu_custom_call.1} parent=275 // pred_fallthru
          _
      $region276: #{tpu_custom_call.1} parent=269 // pred_fallthru
        _
    $region270: #{tpu_custom_call.1} parent=1 // loop_footer
      %s445 = sadd.s32 1, %s441
    $region271: #{tpu_custom_call.1} parent=1 // loop_footer_branch
      %440 = sbr.rel target = $region267
    $region272: #{tpu_custom_call.1} parent=1 // loop_exit
      _
    %v515 = vld [vmem:[#allocation2] sm:$0xff]
    %v516 = vld [vmem:[#allocation2 + $0x8] sm:$0xff]
    %v517 = vld [vmem:[#allocation2 + $0x10] sm:$0xff]
    %v518 = vld [vmem:[#allocation2 + $0x18] sm:$0xff]
    %v519 = vld [vmem:[#allocation2 + $0x20] sm:$0xff]
    %v520 = vld [vmem:[#allocation2 + $0x28] sm:$0xff]
    %v521 = vld [vmem:[#allocation2 + $0x30] sm:$0xff]
    %v522 = vld [vmem:[#allocation2 + $0x38] sm:$0xff]
    %v523 = vpack.c.bf16 %v516, %v515
    %v524 = vpack.c.bf16 %v518, %v517
    %v525 = vpack.c.bf16 %v520, %v519
    %v526 = vpack.c.bf16 %v522, %v521
    %vm527 = vcmask 523264
    %v529 = vsel %vm527, %v432, 0
    %531 = vmatprep.subr.bf16.mxu0 0
    %532 = vmatpush1.bf16.msra.mxu0 %v523
    %533 = vmatprep.subr.bf16.mxu0 0
    %534 = vmatpush1.bf16.msra.mxu0 %v524
    %535 = vmatprep.subr.bf16.mxu0 0
    %536 = vmatpush1.bf16.msra.mxu0 %v525
    %537 = vmatprep.subr.bf16.mxu0 0
    %538 = vmatpush1.bf16.msra.mxu0 %v526
    %539 = vmatprep.subr.bf16.mxu0 0
    %540 = vmatpush1.bf16.msra.mxu0 0
    %541 = vmatprep.subr.bf16.mxu0 0
    %542 = vmatpush1.bf16.msra.mxu0 0
    %543 = vmatprep.subr.bf16.mxu0 0
    %544 = vmatpush1.bf16.msra.mxu0 0
    %545 = vmatprep.subr.bf16.mxu0 0
    %546 = vmatpush1.bf16.msra.mxu0 0
    %547 = vmatprep.subr.bf16.mxu0 0
    %548 = vmatpush1.bf16.msra.mxu0 0
    %549 = vmatprep.subr.bf16.mxu0 0
    %550 = vmatpush1.bf16.msra.mxu0 0
    %551 = vmatprep.subr.bf16.mxu0 0
    %552 = vmatpush1.bf16.msra.mxu0 0
    %553 = vmatprep.subr.bf16.mxu0 0
    %554 = vmatpush1.bf16.msra.mxu0 0
    %555 = vmatprep.subr.bf16.mxu0 0
    %556 = vmatpush1.bf16.msra.mxu0 0
    %557 = vmatprep.subr.bf16.mxu0 0
    %558 = vmatpush1.bf16.msra.mxu0 0
    %559 = vmatprep.subr.bf16.mxu0 0
    %560 = vmatpush1.bf16.msra.mxu0 0
    %561 = vmatprep.subr.bf16.mxu0 0
    %562 = vmatpush1.bf16.msra.mxu0 0
    %563 = vmatprep.mubr.bf16.mxu0 0
    %564 = vmatmul.mubr.bf16.gmra.mrb[0].mxu0 %v529
    %v565 = vpop.f32.mrb[0].mxu0
    %v566 = vadd.f32 0.0, %v565
    %v567 = vpop.f32.mrb[0].mxu0
    %v568 = vpop.f32.mrb[0].mxu0
    %v569 = vpop.f32.mrb[0].mxu0
    %570 = vdwg.mxu0
    %572 = vset.pattern.permute.xlu0 1
    %573 = vperm.xlu0 %572, %v439
    %v574 = vpop.permute.xlu0 %573
    %v576 = vmul.f32 %v566, %v574
    %v577 = vld [vmem:[%s5] sm:$0xf]
    %v578 = vpack.c.bf16 %v576, %v576
    %v579 = vld [vmem:[%s3] sm:$0xf]
    %v580 = vld [vmem:[%s3 + $0x4] sm:$0xf]
    %v581 = vld [vmem:[%s3 + $0x8] sm:$0xf]
    %v582 = vld [vmem:[%s3 + $0xc] sm:$0xf]
    %v583 = vlaneseq
    %v584 = vshrl.u32 %v583, 7
    %v585 = vsub.s32 0, %v584
    %v586 = vrot.slane %v577, %v585
    %v591 = vunpack.c.l.b16 %v579
    %v592 = vunpack.c.l.b16 %v580
    %v593 = vunpack.c.l.b16 %v581
    %v594 = vunpack.c.l.b16 %v582
    %v595 = vpack.c.b16 %v592, %v591
    %v596 = vpack.c.b16 %v594, %v593
    %vm599 = vcmask 261120
    %v601 = vsel %vm599, %v578, 0
    %603 = vmatprep.subr.bf16.mxu0 0
    %604 = vmatpush1.bf16.msra.mxu0 %v595
    %605 = vmatprep.subr.bf16.mxu0 0
    %606 = vmatpush1.bf16.msra.mxu0 %v596
    %607 = vmatprep.subr.bf16.mxu0 0
    %608 = vmatpush1.bf16.msra.mxu0 0
    %609 = vmatprep.subr.bf16.mxu0 0
    %610 = vmatpush1.bf16.msra.mxu0 0
    %611 = vmatprep.subr.bf16.mxu0 0
    %612 = vmatpush1.bf16.msra.mxu0 0
    %613 = vmatprep.subr.bf16.mxu0 0
    %614 = vmatpush1.bf16.msra.mxu0 0
    %615 = vmatprep.subr.bf16.mxu0 0
    %616 = vmatpush1.bf16.msra.mxu0 0
    %617 = vmatprep.subr.bf16.mxu0 0
    %618 = vmatpush1.bf16.msra.mxu0 0
    %619 = vmatprep.subr.bf16.mxu0 0
    %620 = vmatpush1.bf16.msra.mxu0 0
    %621 = vmatprep.subr.bf16.mxu0 0
    %622 = vmatpush1.bf16.msra.mxu0 0
    %623 = vmatprep.subr.bf16.mxu0 0
    %624 = vmatpush1.bf16.msra.mxu0 0
    %625 = vmatprep.subr.bf16.mxu0 0
    %626 = vmatpush1.bf16.msra.mxu0 0
    %627 = vmatprep.subr.bf16.mxu0 0
    %628 = vmatpush1.bf16.msra.mxu0 0
    %629 = vmatprep.subr.bf16.mxu0 0
    %630 = vmatpush1.bf16.msra.mxu0 0
    %631 = vmatprep.subr.bf16.mxu0 0
    %632 = vmatpush1.bf16.msra.mxu0 0
    %633 = vmatprep.subr.bf16.mxu0 0
    %634 = vmatpush1.bf16.msra.mxu0 0
    %635 = vmatprep.mubr.bf16.mxu0 0
    %636 = vmatmul.mubr.bf16.gmra.mrb[0].mxu0 %v601
    %v637 = vpop.f32.mrb[0].mxu0
    %v638 = vadd.f32 %v586, %v637
    %v639 = vpop.f32.mrb[0].mxu0
    %v640 = vpop.f32.mrb[0].mxu0
    %v641 = vpop.f32.mrb[0].mxu0
    %642 = vdwg.mxu0
    %v643 = vmax.f32 %v638, 0.0
    %v644 = vpack.c.bf16 %v643, %v643
    %v645 = vld [vmem:[%s4] sm:$0xf]
    %v646 = vld [vmem:[%s4 + $0x4] sm:$0xf]
    %v647 = vld [vmem:[%s4 + $0x8] sm:$0xf]
    %v648 = vld [vmem:[%s4 + $0xc] sm:$0xf]
    %v649 = vld [vmem:[%s4 + $0x10] sm:$0xf]
    %v650 = vld [vmem:[%s4 + $0x14] sm:$0xf]
    %v651 = vld [vmem:[%s4 + $0x18] sm:$0xf]
    %v652 = vld [vmem:[%s4 + $0x1c] sm:$0xf]
    %v653 = vld [vmem:[%s4 + $0x20] sm:$0xf]
    %v654 = vld [vmem:[%s4 + $0x24] sm:$0xf]
    %v655 = vld [vmem:[%s4 + $0x28] sm:$0xf]
    %v656 = vld [vmem:[%s4 + $0x2c] sm:$0xf]
    %v657 = vld [vmem:[%s4 + $0x30] sm:$0xf]
    %v658 = vld [vmem:[%s4 + $0x34] sm:$0xf]
    %v659 = vld [vmem:[%s4 + $0x38] sm:$0xf]
    %v660 = vld [vmem:[%s4 + $0x3c] sm:$0xf]
    %v661 = vlaneseq
    %v662 = vshrl.u32 %v661, 7
    %v663 = vsub.s32 1, %v662
    %v664 = vrot.slane %v577, %v663
    %v681 = vunpack.c.l.b16 %v645
    %v682 = vunpack.c.l.b16 %v646
    %v683 = vunpack.c.l.b16 %v647
    %v684 = vunpack.c.l.b16 %v648
    %v685 = vunpack.c.l.b16 %v649
    %v686 = vunpack.c.l.b16 %v650
    %v687 = vunpack.c.l.b16 %v651
    %v688 = vunpack.c.l.b16 %v652
    %v689 = vunpack.c.l.b16 %v653
    %v690 = vunpack.c.l.b16 %v654
    %v691 = vunpack.c.l.b16 %v655
    %v692 = vunpack.c.l.b16 %v656
    %v693 = vunpack.c.l.b16 %v657
    %v694 = vunpack.c.l.b16 %v658
    %v695 = vunpack.c.l.b16 %v659
    %v696 = vunpack.c.l.b16 %v660
    %v697 = vpack.c.b16 %v682, %v681
    %v698 = vpack.c.b16 %v684, %v683
    %v699 = vpack.c.b16 %v686, %v685
    %v700 = vpack.c.b16 %v688, %v687
    %v701 = vpack.c.b16 %v690, %v689
    %v702 = vpack.c.b16 %v692, %v691
    %v703 = vpack.c.b16 %v694, %v693
    %v704 = vpack.c.b16 %v696, %v695
    %713 = vmatprep.subr.bf16.mxu0 0
    %714 = vmatpush1.bf16.msra.mxu0 %v697
    %715 = vmatprep.subr.bf16.mxu0 0
    %716 = vmatpush1.bf16.msra.mxu0 %v698
    %717 = vmatprep.subr.bf16.mxu0 0
    %718 = vmatpush1.bf16.msra.mxu0 %v699
    %719 = vmatprep.subr.bf16.mxu0 0
    %720 = vmatpush1.bf16.msra.mxu0 %v700
    %721 = vmatprep.subr.bf16.mxu0 0
    %722 = vmatpush1.bf16.msra.mxu0 %v701
    %723 = vmatprep.subr.bf16.mxu0 0
    %724 = vmatpush1.bf16.msra.mxu0 %v702
    %725 = vmatprep.subr.bf16.mxu0 0
    %726 = vmatpush1.bf16.msra.mxu0 %v703
    %727 = vmatprep.subr.bf16.mxu0 0
    %728 = vmatpush1.bf16.msra.mxu0 %v704
    %729 = vmatprep.subr.bf16.mxu0 0
    %730 = vmatpush1.bf16.msra.mxu0 0
    %731 = vmatprep.subr.bf16.mxu0 0
    %732 = vmatpush1.bf16.msra.mxu0 0
    %733 = vmatprep.subr.bf16.mxu0 0
    %734 = vmatpush1.bf16.msra.mxu0 0
    %735 = vmatprep.subr.bf16.mxu0 0
    %736 = vmatpush1.bf16.msra.mxu0 0
    %737 = vmatprep.subr.bf16.mxu0 0
    %738 = vmatpush1.bf16.msra.mxu0 0
    %739 = vmatprep.subr.bf16.mxu0 0
    %740 = vmatpush1.bf16.msra.mxu0 0
    %741 = vmatprep.subr.bf16.mxu0 0
    %742 = vmatpush1.bf16.msra.mxu0 0
    %743 = vmatprep.subr.bf16.mxu0 0
    %744 = vmatpush1.bf16.msra.mxu0 0
    %745 = vmatprep.mubr.bf16.mxu0 0
    %746 = vmatmul.mubr.bf16.gmra.mrb[0].mxu0 %v644
    %v747 = vpop.f32.mrb[0].mxu0
    %v748 = vadd.f32 %v664, %v747
    %v749 = vpop.f32.mrb[0].mxu0
    %v750 = vpop.f32.mrb[0].mxu0
    %v751 = vpop.f32.mrb[0].mxu0
    %752 = vdwg.mxu0
    %v753 = vmax.f32 %v748, 0.0
    %v754 = vpack.c.bf16 %v753, %v753
    %s755 = scalar_lea.vmem %s4, 64
    %v756 = vld [vmem:[%s755] sm:$0xf]
    %v757 = vld [vmem:[%s755 + $0x4] sm:$0xf]
    %v758 = vld [vmem:[%s755 + $0x8] sm:$0xf]
    %v759 = vld [vmem:[%s755 + $0xc] sm:$0xf]
    %v760 = vld [vmem:[%s755 + $0x10] sm:$0xf]
    %v761 = vld [vmem:[%s755 + $0x14] sm:$0xf]
    %v762 = vld [vmem:[%s755 + $0x18] sm:$0xf]
    %v763 = vld [vmem:[%s755 + $0x1c] sm:$0xf]
    %v764 = vld [vmem:[%s755 + $0x20] sm:$0xf]
    %v765 = vld [vmem:[%s755 + $0x24] sm:$0xf]
    %v766 = vld [vmem:[%s755 + $0x28] sm:$0xf]
    %v767 = vld [vmem:[%s755 + $0x2c] sm:$0xf]
    %v768 = vld [vmem:[%s755 + $0x30] sm:$0xf]
    %v769 = vld [vmem:[%s755 + $0x34] sm:$0xf]
    %v770 = vld [vmem:[%s755 + $0x38] sm:$0xf]
    %v771 = vld [vmem:[%s755 + $0x3c] sm:$0xf]
    %v772 = vlaneseq
    %v773 = vshrl.u32 %v772, 7
    %v774 = vsub.s32 2, %v773
    %v775 = vrot.slane %v577, %v774
    %v792 = vunpack.c.l.b16 %v756
    %v793 = vunpack.c.l.b16 %v757
    %v794 = vunpack.c.l.b16 %v758
    %v795 = vunpack.c.l.b16 %v759
    %v796 = vunpack.c.l.b16 %v760
    %v797 = vunpack.c.l.b16 %v761
    %v798 = vunpack.c.l.b16 %v762
    %v799 = vunpack.c.l.b16 %v763
    %v800 = vunpack.c.l.b16 %v764
    %v801 = vunpack.c.l.b16 %v765
    %v802 = vunpack.c.l.b16 %v766
    %v803 = vunpack.c.l.b16 %v767
    %v804 = vunpack.c.l.b16 %v768
    %v805 = vunpack.c.l.b16 %v769
    %v806 = vunpack.c.l.b16 %v770
    %v807 = vunpack.c.l.b16 %v771
    %v808 = vpack.c.b16 %v793, %v792
    %v809 = vpack.c.b16 %v795, %v794
    %v810 = vpack.c.b16 %v797, %v796
    %v811 = vpack.c.b16 %v799, %v798
    %v812 = vpack.c.b16 %v801, %v800
    %v813 = vpack.c.b16 %v803, %v802
    %v814 = vpack.c.b16 %v805, %v804
    %v815 = vpack.c.b16 %v807, %v806
    %824 = vmatprep.subr.bf16.mxu0 0
    %825 = vmatpush1.bf16.msra.mxu0 %v808
    %826 = vmatprep.subr.bf16.mxu0 0
    %827 = vmatpush1.bf16.msra.mxu0 %v809
    %828 = vmatprep.subr.bf16.mxu0 0
    %829 = vmatpush1.bf16.msra.mxu0 %v810
    %830 = vmatprep.subr.bf16.mxu0 0
    %831 = vmatpush1.bf16.msra.mxu0 %v811
    %832 = vmatprep.subr.bf16.mxu0 0
    %833 = vmatpush1.bf16.msra.mxu0 %v812
    %834 = vmatprep.subr.bf16.mxu0 0
    %835 = vmatpush1.bf16.msra.mxu0 %v813
    %836 = vmatprep.subr.bf16.mxu0 0
    %837 = vmatpush1.bf16.msra.mxu0 %v814
    %838 = vmatprep.subr.bf16.mxu0 0
    %839 = vmatpush1.bf16.msra.mxu0 %v815
    %840 = vmatprep.subr.bf16.mxu0 0
    %841 = vmatpush1.bf16.msra.mxu0 0
    %842 = vmatprep.subr.bf16.mxu0 0
    %843 = vmatpush1.bf16.msra.mxu0 0
    %844 = vmatprep.subr.bf16.mxu0 0
    %845 = vmatpush1.bf16.msra.mxu0 0
    %846 = vmatprep.subr.bf16.mxu0 0
    %847 = vmatpush1.bf16.msra.mxu0 0
    %848 = vmatprep.subr.bf16.mxu0 0
    %849 = vmatpush1.bf16.msra.mxu0 0
    %850 = vmatprep.subr.bf16.mxu0 0
    %851 = vmatpush1.bf16.msra.mxu0 0
    %852 = vmatprep.subr.bf16.mxu0 0
    %853 = vmatpush1.bf16.msra.mxu0 0
    %854 = vmatprep.subr.bf16.mxu0 0
    %855 = vmatpush1.bf16.msra.mxu0 0
    %856 = vmatprep.mubr.bf16.mxu0 0
    %857 = vmatmul.mubr.bf16.gmra.mrb[0].mxu0 %v754
    %v858 = vpop.f32.mrb[0].mxu0
    %v859 = vadd.f32 %v775, %v858
    %v860 = vpop.f32.mrb[0].mxu0
    %v861 = vpop.f32.mrb[0].mxu0
    %v862 = vpop.f32.mrb[0].mxu0
    %863 = vdwg.mxu0
    %v864 = vmax.f32 %v859, 0.0
    %v865 = vpack.c.bf16 %v864, %v864
    %s866 = scalar_lea.vmem %s4, 128
    %v867 = vld [vmem:[%s866] sm:$0xf]
    %v868 = vld [vmem:[%s866 + $0x4] sm:$0xf]
    %v869 = vld [vmem:[%s866 + $0x8] sm:$0xf]
    %v870 = vld [vmem:[%s866 + $0xc] sm:$0xf]
    %v871 = vld [vmem:[%s866 + $0x10] sm:$0xf]
    %v872 = vld [vmem:[%s866 + $0x14] sm:$0xf]
    %v873 = vld [vmem:[%s866 + $0x18] sm:$0xf]
    %v874 = vld [vmem:[%s866 + $0x1c] sm:$0xf]
    %v875 = vld [vmem:[%s866 + $0x20] sm:$0xf]
    %v876 = vld [vmem:[%s866 + $0x24] sm:$0xf]
    %v877 = vld [vmem:[%s866 + $0x28] sm:$0xf]
    %v878 = vld [vmem:[%s866 + $0x2c] sm:$0xf]
    %v879 = vld [vmem:[%s866 + $0x30] sm:$0xf]
    %v880 = vld [vmem:[%s866 + $0x34] sm:$0xf]
    %v881 = vld [vmem:[%s866 + $0x38] sm:$0xf]
    %v882 = vld [vmem:[%s866 + $0x3c] sm:$0xf]
    %v883 = vlaneseq
    %v884 = vshrl.u32 %v883, 7
    %v885 = vsub.s32 3, %v884
    %v886 = vrot.slane %v577, %v885
    %v903 = vunpack.c.l.b16 %v867
    %v904 = vunpack.c.l.b16 %v868
    %v905 = vunpack.c.l.b16 %v869
    %v906 = vunpack.c.l.b16 %v870
    %v907 = vunpack.c.l.b16 %v871
    %v908 = vunpack.c.l.b16 %v872
    %v909 = vunpack.c.l.b16 %v873
    %v910 = vunpack.c.l.b16 %v874
    %v911 = vunpack.c.l.b16 %v875
    %v912 = vunpack.c.l.b16 %v876
    %v913 = vunpack.c.l.b16 %v877
    %v914 = vunpack.c.l.b16 %v878
    %v915 = vunpack.c.l.b16 %v879
    %v916 = vunpack.c.l.b16 %v880
    %v917 = vunpack.c.l.b16 %v881
    %v918 = vunpack.c.l.b16 %v882
    %v919 = vpack.c.b16 %v904, %v903
    %v920 = vpack.c.b16 %v906, %v905
    %v921 = vpack.c.b16 %v908, %v907
    %v922 = vpack.c.b16 %v910, %v909
    %v923 = vpack.c.b16 %v912, %v911
    %v924 = vpack.c.b16 %v914, %v913
    %v925 = vpack.c.b16 %v916, %v915
    %v926 = vpack.c.b16 %v918, %v917
    %935 = vmatprep.subr.bf16.mxu0 0
    %936 = vmatpush1.bf16.msra.mxu0 %v919
    %937 = vmatprep.subr.bf16.mxu0 0
    %938 = vmatpush1.bf16.msra.mxu0 %v920
    %939 = vmatprep.subr.bf16.mxu0 0
    %940 = vmatpush1.bf16.msra.mxu0 %v921
    %941 = vmatprep.subr.bf16.mxu0 0
    %942 = vmatpush1.bf16.msra.mxu0 %v922
    %943 = vmatprep.subr.bf16.mxu0 0
    %944 = vmatpush1.bf16.msra.mxu0 %v923
    %945 = vmatprep.subr.bf16.mxu0 0
    %946 = vmatpush1.bf16.msra.mxu0 %v924
    %947 = vmatprep.subr.bf16.mxu0 0
    %948 = vmatpush1.bf16.msra.mxu0 %v925
    %949 = vmatprep.subr.bf16.mxu0 0
    %950 = vmatpush1.bf16.msra.mxu0 %v926
    %951 = vmatprep.subr.bf16.mxu0 0
    %952 = vmatpush1.bf16.msra.mxu0 0
    %953 = vmatprep.subr.bf16.mxu0 0
    %954 = vmatpush1.bf16.msra.mxu0 0
    %955 = vmatprep.subr.bf16.mxu0 0
    %956 = vmatpush1.bf16.msra.mxu0 0
    %957 = vmatprep.subr.bf16.mxu0 0
    %958 = vmatpush1.bf16.msra.mxu0 0
    %959 = vmatprep.subr.bf16.mxu0 0
    %960 = vmatpush1.bf16.msra.mxu0 0
    %961 = vmatprep.subr.bf16.mxu0 0
    %962 = vmatpush1.bf16.msra.mxu0 0
    %963 = vmatprep.subr.bf16.mxu0 0
    %964 = vmatpush1.bf16.msra.mxu0 0
    %965 = vmatprep.subr.bf16.mxu0 0
    %966 = vmatpush1.bf16.msra.mxu0 0
    %967 = vmatprep.mubr.bf16.mxu0 0
    %968 = vmatmul.mubr.bf16.gmra.mrb[0].mxu0 %v865
    %v969 = vpop.f32.mrb[0].mxu0
    %v970 = vadd.f32 %v886, %v969
    %v971 = vpop.f32.mrb[0].mxu0
    %v972 = vpop.f32.mrb[0].mxu0
    %v973 = vpop.f32.mrb[0].mxu0
    %974 = vdwg.mxu0
    %v975 = vmax.f32 %v970, 0.0
    %976 = vst [vmem:[#allocation7] sm:$0xff] %v975
    // Predicated region
    $region307: #{tpu_custom_call.1} parent=1 // pred_check
      _
    $region308: #{tpu_custom_call.1} parent=1 // pred_check_branch
      %978 = sbr.rel (0) target = $region310
    $region309: #{tpu_custom_call.1} parent=1 // pred_region
      %s980 = ssub.s32 128, 128
      %981 = vsyncadd [#allocation5], %s980
      %s983 = sshll.u32 [#allocation7], 4
      %s984 = int_to_ptr.vmem [resolvable:$true] %s983
      %986 = dma.vmem_to_hbm [thread:$0]  %s984, 128, %s6, [#allocation5]
    $region310: #{tpu_custom_call.1} parent=1 // pred_fallthru
      _
    // Predicated region
    $region311: #{tpu_custom_call.1} parent=1 // pred_check
      _
    $region312: #{tpu_custom_call.1} parent=1 // pred_check_branch
      %988 = sbr.rel (0) target = $region314
    $region313: #{tpu_custom_call.1} parent=1 // pred_region
      %989 = dma.done [#allocation5], 128
    $region314: #{tpu_custom_call.1} parent=1 // pred_fallthru
      _
    %990 = vsyncpa [#allocation5], 1
    %991 = vsyncpa [#allocation6], 1
  %992 = vsyncmov [#allocation3]
  %s993 = vpop.sfrf %992
  %p994 = scmp.eq.s32.totalorder %s993, 0
  %p995 = pneg %p994
  %997 = shalt.err (%p995)
  %s998 = scalar_lea.sflag [#allocation3], 1
  %999 = vsyncmov %s998
  %s1000 = vpop.sfrf %999
  %p1001 = scmp.eq.s32.totalorder %s1000, 0
  %p1002 = pneg %p1001
  %1004 = shalt.err (%p1002)
  %s1005 = scalar_lea.sflag [#allocation3], 2
  %1006 = vsyncmov %s1005
  %s1007 = vpop.sfrf %1006
  %p1008 = scmp.eq.s32.totalorder %s1007, 0
  %p1009 = pneg %p1008
  %1011 = shalt.err (%p1009)
  %s1012 = scalar_lea.sflag [#allocation3], 3
  %1013 = vsyncmov %s1012
  %s1014 = vpop.sfrf %1013
  %p1015 = scmp.eq.s32.totalorder %s1014, 0
  %p1016 = pneg %p1015
  %1018 = shalt.err (%p1016)
  %s1019 = scalar_lea.sflag [#allocation3], 4
  %1020 = vsyncmov %s1019
  %s1021 = vpop.sfrf %1020
  %p1022 = scmp.eq.s32.totalorder %s1021, 0
  %p1023 = pneg %p1022
  %1025 = shalt.err (%p1023)
  %s1026 = scalar_lea.sflag [#allocation3], 5
  %1027 = vsyncmov %s1026
  %s1028 = vpop.sfrf %1027
  %p1029 = scmp.eq.s32.totalorder %s1028, 0
  %p1030 = pneg %p1029
  %1032 = shalt.err (%p1030)
  %s1033 = scalar_lea.sflag [#allocation3], 6
  %1034 = vsyncmov %s1033
  %s1035 = vpop.sfrf %1034
  %p1036 = scmp.eq.s32.totalorder %s1035, 0
  %p1037 = pneg %p1036
  %1039 = shalt.err (%p1037)
  %s1040 = scalar_lea.sflag [#allocation3], 7
  %1041 = vsyncmov %s1040
  %s1042 = vpop.sfrf %1041
  %p1043 = scmp.eq.s32.totalorder %s1042, 0
  %p1044 = pneg %p1043
  %1046 = shalt.err (%p1044)

</llo_original>
